<compile_context>
chip_gen: v7x
topology: tpu7x:2x2x1
jax: 0.10.0
libtpu: 0.0.40
codegen_flags: <defaults>
</compile_context>

<pallas_src>
import functools
import math
import numpy as np
import jax
import jax.numpy as jnp
from jax.experimental import pallas as pl
from jax.experimental.pallas import tpu as pltpu


# ----------------------------------------------------------------------------
# Fused kernel.
#   x     : (T, E)   flattened, keep-masked history embeddings (T = B*S)
#   bias  : (T, T)   additive attention bias (0 = same-batch & valid key,
#                    -1e30 = cross-batch or padded key)
#   seg   : (B, T)   segment-pooling matrix with the keep mask folded in
#   weights stacked on a leading layer axis, pre-transposed to (in, out).
# ----------------------------------------------------------------------------
def fused_segment1_kernel(x_ref, bias_ref, seg_ref,
                          wqkv_ref, bqkv_ref, wo_ref, bo_ref,
                          ln1w_ref, ln1b_ref,
                          w1_ref, b1_ref, w2_ref, b2_ref,
                          ln2w_ref, ln2b_ref,
                          wl_ref, bl_ref,
                          o_ref, *, nhead, nlayers):
    T, E = x_ref.shape
    hd = E // nhead
    inv_e = 1.0 / float(E)

    bias = bias_ref[...]                                    # (T, T)
    xf = x_ref[...]                                         # (T, E)

    for l in range(nlayers):                                # small static const
        # --- fused QKV projection: one lane-dense MXU matmul -------------------
        qkv = jnp.dot(xf, wqkv_ref[l],
                      preferred_element_type=jnp.float32) + bqkv_ref[l]   # (T, 3E)

        # --- per-head attention on flattened (T x T) block-diagonal scores -----
        heads = []
        for h in range(nhead):                              # small static const
            q = qkv[:, h * hd:(h + 1) * hd]                 # (T, hd), scale folded in
            k = qkv[:, E + h * hd:E + (h + 1) * hd]
            v = qkv[:, 2 * E + h * hd:2 * E + (h + 1) * hd]

            sc = jax.lax.dot_general(
                q, k, (((1,), (1,)), ((), ())),
                preferred_element_type=jnp.float32) + bias   # (T, T)
            sc = sc - jnp.max(sc, axis=-1, keepdims=True)
            p = jnp.exp(sc)
            p = p / jnp.sum(p, axis=-1, keepdims=True)       # exact softmax
            heads.append(jnp.dot(p, v, preferred_element_type=jnp.float32))

        oh = jnp.concatenate(heads, axis=-1)                 # (T, E), lane concat
        attn = jnp.dot(oh, wo_ref[l],
                       preferred_element_type=jnp.float32) + bo_ref[l]    # (T, E)

        # --- residual + LayerNorm1 (one-pass mean / var, eps=1e-5) -------------
        y = xf + attn
        mu = jnp.sum(y, axis=-1, keepdims=True) * inv_e
        ey2 = jnp.sum(y * y, axis=-1, keepdims=True) * inv_e
        var = ey2 - mu * mu
        y = (y - mu) * jax.lax.rsqrt(var + 1e-5) * ln1w_ref[l] + ln1b_ref[l]

        # --- FFN (relu) + residual + LayerNorm2 ---------------------------------
        hmid = jnp.maximum(
            jnp.dot(y, w1_ref[l], preferred_element_type=jnp.float32) + b1_ref[l],
            0.0)
        ff = jnp.dot(hmid, w2_ref[l],
                     preferred_element_type=jnp.float32) + b2_ref[l]
        z = y + ff
        mu2 = jnp.sum(z, axis=-1, keepdims=True) * inv_e
        ez2 = jnp.sum(z * z, axis=-1, keepdims=True) * inv_e
        var2 = ez2 - mu2 * mu2
        xf = (z - mu2) * jax.lax.rsqrt(var2 + 1e-5) * ln2w_ref[l] + ln2b_ref[l]

    # --- final Linear(E->H), masked per-batch sum (MXU), L2 normalize -----------
    yl = jnp.dot(xf, wl_ref[...],
                 preferred_element_type=jnp.float32) + bl_ref[...]        # (T, H)
    s = jnp.dot(seg_ref[...], yl, preferred_element_type=jnp.float32)    # (B, H)
    sq = jnp.sum(s * s, axis=-1, keepdims=True)                          # (B, 1)
    # F.normalize(p=2, dim=1, eps=1e-12):  s / max(||s||, 1e-12)
    o_ref[...] = s * jax.lax.rsqrt(jnp.maximum(sq, 1e-24))


# ----------------------------------------------------------------------------
# Deterministic parameter init in kernel-friendly layouts:
#   wqkv : (L, E, 3E)   heads concatenated along the lane axis, q-part pre-scaled
#   bqkv : (L, 1, 3E)
#   wo   : (L, E, E)    out_proj.weight transposed  (in, out)
#   w1/w2: (L, E, Th) / (L, Th, E)
#   wl   : (E, H)
# ----------------------------------------------------------------------------
def init_params(key, emb_dim, t_hid, hid_dim, nlayers, nhead):
    hd = emb_dim // nhead
    L = nlayers
    E = emb_dim
    s = 0.08
    scale = 1.0 / math.sqrt(hd)
    ks = jax.random.split(key, 10)
    rnd = lambda k, shape: jax.random.normal(k, shape, jnp.float32) * s

    wqkv = rnd(ks[0], (L, E, 3 * E))
    bqkv = rnd(ks[1], (L, 1, 3 * E))
    # fold the 1/sqrt(head_dim) attention scale into the Q third
    wqkv = wqkv.at[:, :, :E].multiply(scale)
    bqkv = bqkv.at[:, :, :E].multiply(scale)

    wo = rnd(ks[2], (L, E, E))
    bo = rnd(ks[3], (L, 1, E))
    ln1w = jnp.ones((L, 1, E), jnp.float32)
    ln1b = jnp.zeros((L, 1, E), jnp.float32)
    w1 = rnd(ks[4], (L, E, t_hid))
    b1 = rnd(ks[5], (L, 1, t_hid))
    w2 = rnd(ks[6], (L, t_hid, E))
    b2 = rnd(ks[7], (L, 1, E))
    ln2w = jnp.ones((L, 1, E), jnp.float32)
    ln2b = jnp.zeros((L, 1, E), jnp.float32)
    wl = rnd(ks[8], (E, hid_dim))
    bl = rnd(ks[9], (1, hid_dim))
    return (wqkv, bqkv, wo, bo, ln1w, ln1b,
            w1, b1, w2, b2, ln2w, ln2b, wl, bl)


# ----------------------------------------------------------------------------
# Forward: embedding gather / masks / flattening in XLA, one fused pallas_call.
# Rows with history_lens == 0 are processed anyway (per-row independent, keep
# mask all-zero -> pooled sum is exactly zero); the trailing `valid` multiply
# reproduces the original scatter into a zero tensor exactly.
# ----------------------------------------------------------------------------
def make_forward(params, nhead, nlayers):
    (wqkv, bqkv, wo, bo, ln1w, ln1b,
     w1, b1, w2, b2, ln2w, ln2b, wl, bl) = params
    hid_dim = wl.shape[1]

    @jax.jit
    def forward(history_items, history_lens, item_emb):
        items = history_items.astype(jnp.int32)              # (B, S)
        B, S = items.shape
        T = B * S
        E = item_emb.shape[1]

        pad = items < 0
        keep = (~pad).astype(jnp.float32)                    # (B, S)
        keep_flat = keep.reshape(T)
        safe_idx = jnp.where(pad, 0, items)
        his = jnp.take(item_emb, safe_idx, axis=0) * keep[:, :, None]
        his_flat = his.reshape(T, E)                          # (T, E)

        # block-diagonal additive attention bias (cross-batch + padded keys masked)
        batch_of = jnp.arange(T, dtype=jnp.int32) // S        # (T,)
        same_batch = batch_of[:, None] == batch_of[None, :]
        key_valid = keep_flat[None, :] > 0.0
        attn_bias = jnp.where(same_batch & key_valid,
                              jnp.float32(0.0), jnp.float32(-1e30))       # (T, T)

        # segment-pooling matrix with keep mask folded in: (B, T)
        seg = ((batch_of[None, :] == jnp.arange(B, dtype=jnp.int32)[:, None])
               .astype(jnp.float32) * keep_flat[None, :])

        valid = (history_lens > 0).astype(jnp.float32)[:, None]           # (B, 1)

        kernel = functools.partial(fused_segment1_kernel,
                                   nhead=nhead, nlayers=nlayers)
        args = (his_flat, attn_bias, seg,
                wqkv, bqkv, wo, bo, ln1w, ln1b,
                w1, b1, w2, b2, ln2w, ln2b, wl, bl)
        user_masked = pl.pallas_call(
            kernel,
            out_shape=jax.ShapeDtypeStruct((B, hid_dim), jnp.float32),
            in_specs=[pl.BlockSpec(memory_space=pltpu.MemorySpace.VMEM)
                      for _ in args],
            out_specs=pl.BlockSpec(memory_space=pltpu.MemorySpace.VMEM),
        )(*args)
        return user_masked * valid                            # zero empty-history rows

    return forward


if __name__ == "__main__":
    # small config: emb_dim=32, hid_dim=32, nhead=2, nlayers=2, t_hid_dim=64, seq=8
    B, S, E, H = 4, 8, 32, 32
    nhead, nlayers, t_hid = 2, 2, 64
    num_items = 20

    key = jax.random.PRNGKey(0)
    k_emb, k_par = jax.random.split(key)
    item_emb = jax.random.normal(k_emb, (num_items, E), jnp.float32)

    rng = np.random.default_rng(0)
    history_items = rng.integers(0, num_items, size=(B, S)).astype(np.int32)
    history_lens = np.array([5, 0, 8, 3], dtype=np.int32)     # one empty-history row
    for b in range(B):
        history_items[b, history_lens[b]:] = -1               # -1 = padding
    params = init_params(k_par, E, t_hid, H, nlayers, nhead)

    forward = make_forward(params, nhead, nlayers)
    user_emb = forward(jnp.asarray(history_items), jnp.asarray(history_lens), item_emb)
    user_emb = jax.block_until_ready(user_emb)

    assert user_emb.shape == (B, H)
    assert bool(jnp.all(jnp.isfinite(user_emb)))
    assert float(jnp.abs(user_emb[1]).sum()) == 0.0           # empty-history row stays zero
    norms = jnp.linalg.norm(user_emb, axis=1)
    assert bool(jnp.all(jnp.abs(norms[jnp.array([0, 2, 3])] - 1.0) < 1e-3))  # L2-normalized
    print("KERNEL_OK")
</pallas_src>

<mosaic_0001>
module attributes {stable_mosaic.version = 11 : i64} {
  func.func @fused_segment1_kernel(%arg0: memref<32x32xf32, #tpu.memory_space<vmem>>, %arg1: memref<32x32xf32, #tpu.memory_space<vmem>>, %arg2: memref<4x32xf32, #tpu.memory_space<vmem>>, %arg3: memref<2x32x96xf32, #tpu.memory_space<vmem>>, %arg4: memref<2x1x96xf32, #tpu.memory_space<vmem>>, %arg5: memref<2x32x32xf32, #tpu.memory_space<vmem>>, %arg6: memref<2x1x32xf32, #tpu.memory_space<vmem>>, %arg7: memref<2x1x32xf32, #tpu.memory_space<vmem>>, %arg8: memref<2x1x32xf32, #tpu.memory_space<vmem>>, %arg9: memref<2x32x64xf32, #tpu.memory_space<vmem>>, %arg10: memref<2x1x64xf32, #tpu.memory_space<vmem>>, %arg11: memref<2x64x32xf32, #tpu.memory_space<vmem>>, %arg12: memref<2x1x32xf32, #tpu.memory_space<vmem>>, %arg13: memref<2x1x32xf32, #tpu.memory_space<vmem>>, %arg14: memref<2x1x32xf32, #tpu.memory_space<vmem>>, %arg15: memref<32x32xf32, #tpu.memory_space<vmem>>, %arg16: memref<1x32xf32, #tpu.memory_space<vmem>>, %arg17: memref<4x32xf32, #tpu.memory_space<vmem>>) attributes {dimension_semantics = [], scalar_prefetch = 0 : i64, scratch_operands = 0 : i64, tpu.core_type = #tpu.core_type<tc>} {
    %c0 = arith.constant 0 : index
    %c0_0 = arith.constant 0 : index
    %0 = vector.load %arg1[%c0, %c0_0] : memref<32x32xf32, #tpu.memory_space<vmem>>, vector<32x32xf32>
    %c0_1 = arith.constant 0 : index
    %c0_2 = arith.constant 0 : index
    %1 = vector.load %arg0[%c0_1, %c0_2] : memref<32x32xf32, #tpu.memory_space<vmem>>, vector<32x32xf32>
    %c0_3 = arith.constant 0 : index
    %c0_4 = arith.constant 0 : index
    %c0_5 = arith.constant 0 : index
    %2 = vector.load %arg3[%c0_3, %c0_4, %c0_5] : memref<2x32x96xf32, #tpu.memory_space<vmem>>, vector<1x32x96xf32>
    %3 = vector.shape_cast %2 : vector<1x32x96xf32> to vector<32x96xf32>
    %cst = arith.constant dense<0.000000e+00> : vector<32x96xf32>
    %4 = tpu.matmul %1, %3, %cst {dimension_numbers = #tpu.dot_dimension_numbers<[1], [0], [0], [1], [0, 0, 1, 1], [], []>} : vector<32x32xf32>, vector<32x96xf32>, vector<32x96xf32> -> vector<32x96xf32>
    %c0_6 = arith.constant 0 : index
    %c0_7 = arith.constant 0 : index
    %c0_8 = arith.constant 0 : index
    %5 = vector.load %arg4[%c0_6, %c0_7, %c0_8] : memref<2x1x96xf32, #tpu.memory_space<vmem>>, vector<1x1x96xf32>
    %6 = vector.shape_cast %5 : vector<1x1x96xf32> to vector<1x96xf32>
    %7 = vector.broadcast %6 : vector<1x96xf32> to vector<32x96xf32>
    %8 = arith.addf %4, %7 : vector<32x96xf32>
    %9 = vector.extract_strided_slice %8 {offsets = [0, 0], sizes = [32, 16], strides = [1, 1]} : vector<32x96xf32> to vector<32x16xf32>
    %10 = vector.extract_strided_slice %8 {offsets = [0, 32], sizes = [32, 16], strides = [1, 1]} : vector<32x96xf32> to vector<32x16xf32>
    %11 = vector.extract_strided_slice %8 {offsets = [0, 64], sizes = [32, 16], strides = [1, 1]} : vector<32x96xf32> to vector<32x16xf32>
    %cst_9 = arith.constant dense<0.000000e+00> : vector<32x32xf32>
    %12 = tpu.matmul %9, %10, %cst_9 {dimension_numbers = #tpu.dot_dimension_numbers<[1], [1], [0], [0], [0, 0, 1, 0], [], []>} : vector<32x16xf32>, vector<32x16xf32>, vector<32x32xf32> -> vector<32x32xf32>
    %13 = arith.addf %12, %0 : vector<32x32xf32>
    %cst_10 = arith.constant dense<0xFF800000> : vector<32xf32>
    %14 = vector.multi_reduction <maximumf>, %13, %cst_10 [1] : vector<32x32xf32> to vector<32xf32>
    %15 = vector.shape_cast %14 : vector<32xf32> to vector<32x1xf32>
    %16 = vector.broadcast %15 : vector<32x1xf32> to vector<32x32xf32>
    %17 = arith.subf %13, %16 : vector<32x32xf32>
    %18 = math.exp %17 : vector<32x32xf32>
    %cst_11 = arith.constant dense<0.000000e+00> : vector<32xf32>
    %19 = vector.multi_reduction <add>, %18, %cst_11 [1] : vector<32x32xf32> to vector<32xf32>
    %20 = vector.shape_cast %19 : vector<32xf32> to vector<32x1xf32>
    %21 = vector.broadcast %20 : vector<32x1xf32> to vector<32x32xf32>
    %22 = arith.divf %18, %21 : vector<32x32xf32>
    %cst_12 = arith.constant dense<0.000000e+00> : vector<32x16xf32>
    %23 = tpu.matmul %22, %11, %cst_12 {dimension_numbers = #tpu.dot_dimension_numbers<[1], [0], [0], [1], [0, 0, 1, 1], [], []>} : vector<32x32xf32>, vector<32x16xf32>, vector<32x16xf32> -> vector<32x16xf32>
    %24 = vector.extract_strided_slice %8 {offsets = [0, 16], sizes = [32, 16], strides = [1, 1]} : vector<32x96xf32> to vector<32x16xf32>
    %25 = vector.extract_strided_slice %8 {offsets = [0, 48], sizes = [32, 16], strides = [1, 1]} : vector<32x96xf32> to vector<32x16xf32>
    %26 = vector.extract_strided_slice %8 {offsets = [0, 80], sizes = [32, 16], strides = [1, 1]} : vector<32x96xf32> to vector<32x16xf32>
    %cst_13 = arith.constant dense<0.000000e+00> : vector<32x32xf32>
    %27 = tpu.matmul %24, %25, %cst_13 {dimension_numbers = #tpu.dot_dimension_numbers<[1], [1], [0], [0], [0, 0, 1, 0], [], []>} : vector<32x16xf32>, vector<32x16xf32>, vector<32x32xf32> -> vector<32x32xf32>
    %28 = arith.addf %27, %0 : vector<32x32xf32>
    %cst_14 = arith.constant dense<0xFF800000> : vector<32xf32>
    %29 = vector.multi_reduction <maximumf>, %28, %cst_14 [1] : vector<32x32xf32> to vector<32xf32>
    %30 = vector.shape_cast %29 : vector<32xf32> to vector<32x1xf32>
    %31 = vector.broadcast %30 : vector<32x1xf32> to vector<32x32xf32>
    %32 = arith.subf %28, %31 : vector<32x32xf32>
    %33 = math.exp %32 : vector<32x32xf32>
    %cst_15 = arith.constant dense<0.000000e+00> : vector<32xf32>
    %34 = vector.multi_reduction <add>, %33, %cst_15 [1] : vector<32x32xf32> to vector<32xf32>
    %35 = vector.shape_cast %34 : vector<32xf32> to vector<32x1xf32>
    %36 = vector.broadcast %35 : vector<32x1xf32> to vector<32x32xf32>
    %37 = arith.divf %33, %36 : vector<32x32xf32>
    %cst_16 = arith.constant dense<0.000000e+00> : vector<32x16xf32>
    %38 = tpu.matmul %37, %26, %cst_16 {dimension_numbers = #tpu.dot_dimension_numbers<[1], [0], [0], [1], [0, 0, 1, 1], [], []>} : vector<32x32xf32>, vector<32x16xf32>, vector<32x16xf32> -> vector<32x16xf32>
    %39 = tpu.concatenate %23, %38 in 1 : vector<32x16xf32>, vector<32x16xf32> -> vector<32x32xf32>
    %c0_17 = arith.constant 0 : index
    %c0_18 = arith.constant 0 : index
    %c0_19 = arith.constant 0 : index
    %40 = vector.load %arg5[%c0_17, %c0_18, %c0_19] : memref<2x32x32xf32, #tpu.memory_space<vmem>>, vector<1x32x32xf32>
    %41 = vector.shape_cast %40 : vector<1x32x32xf32> to vector<32x32xf32>
    %cst_20 = arith.constant dense<0.000000e+00> : vector<32x32xf32>
    %42 = tpu.matmul %39, %41, %cst_20 {dimension_numbers = #tpu.dot_dimension_numbers<[1], [0], [0], [1], [0, 0, 1, 1], [], []>} : vector<32x32xf32>, vector<32x32xf32>, vector<32x32xf32> -> vector<32x32xf32>
    %c0_21 = arith.constant 0 : index
    %c0_22 = arith.constant 0 : index
    %c0_23 = arith.constant 0 : index
    %43 = vector.load %arg6[%c0_21, %c0_22, %c0_23] : memref<2x1x32xf32, #tpu.memory_space<vmem>>, vector<1x1x32xf32>
    %44 = vector.shape_cast %43 : vector<1x1x32xf32> to vector<1x32xf32>
    %45 = vector.broadcast %44 : vector<1x32xf32> to vector<32x32xf32>
    %46 = arith.addf %42, %45 : vector<32x32xf32>
    %47 = arith.addf %1, %46 : vector<32x32xf32>
    %cst_24 = arith.constant dense<0.000000e+00> : vector<32xf32>
    %48 = vector.multi_reduction <add>, %47, %cst_24 [1] : vector<32x32xf32> to vector<32xf32>
    %49 = vector.shape_cast %48 : vector<32xf32> to vector<32x1xf32>
    %cst_25 = arith.constant 3.125000e-02 : f32
    %50 = vector.broadcast %cst_25 : f32 to vector<32x1xf32>
    %51 = arith.mulf %49, %50 : vector<32x1xf32>
    %52 = arith.mulf %47, %47 : vector<32x32xf32>
    %cst_26 = arith.constant dense<0.000000e+00> : vector<32xf32>
    %53 = vector.multi_reduction <add>, %52, %cst_26 [1] : vector<32x32xf32> to vector<32xf32>
    %54 = vector.shape_cast %53 : vector<32xf32> to vector<32x1xf32>
    %cst_27 = arith.constant 3.125000e-02 : f32
    %55 = vector.broadcast %cst_27 : f32 to vector<32x1xf32>
    %56 = arith.mulf %54, %55 : vector<32x1xf32>
    %57 = arith.mulf %51, %51 : vector<32x1xf32>
    %58 = arith.subf %56, %57 : vector<32x1xf32>
    %59 = vector.broadcast %51 : vector<32x1xf32> to vector<32x32xf32>
    %60 = arith.subf %47, %59 : vector<32x32xf32>
    %cst_28 = arith.constant 9.99999974E-6 : f32
    %61 = vector.broadcast %cst_28 : f32 to vector<32x1xf32>
    %62 = arith.addf %58, %61 : vector<32x1xf32>
    %63 = math.rsqrt %62 : vector<32x1xf32>
    %64 = vector.broadcast %63 : vector<32x1xf32> to vector<32x32xf32>
    %65 = arith.mulf %60, %64 : vector<32x32xf32>
    %c0_29 = arith.constant 0 : index
    %c0_30 = arith.constant 0 : index
    %c0_31 = arith.constant 0 : index
    %66 = vector.load %arg7[%c0_29, %c0_30, %c0_31] : memref<2x1x32xf32, #tpu.memory_space<vmem>>, vector<1x1x32xf32>
    %67 = vector.shape_cast %66 : vector<1x1x32xf32> to vector<1x32xf32>
    %68 = vector.broadcast %67 : vector<1x32xf32> to vector<32x32xf32>
    %69 = arith.mulf %65, %68 : vector<32x32xf32>
    %c0_32 = arith.constant 0 : index
    %c0_33 = arith.constant 0 : index
    %c0_34 = arith.constant 0 : index
    %70 = vector.load %arg8[%c0_32, %c0_33, %c0_34] : memref<2x1x32xf32, #tpu.memory_space<vmem>>, vector<1x1x32xf32>
    %71 = vector.shape_cast %70 : vector<1x1x32xf32> to vector<1x32xf32>
    %72 = vector.broadcast %71 : vector<1x32xf32> to vector<32x32xf32>
    %73 = arith.addf %69, %72 : vector<32x32xf32>
    %c0_35 = arith.constant 0 : index
    %c0_36 = arith.constant 0 : index
    %c0_37 = arith.constant 0 : index
    %74 = vector.load %arg9[%c0_35, %c0_36, %c0_37] : memref<2x32x64xf32, #tpu.memory_space<vmem>>, vector<1x32x64xf32>
    %75 = vector.shape_cast %74 : vector<1x32x64xf32> to vector<32x64xf32>
    %cst_38 = arith.constant dense<0.000000e+00> : vector<32x64xf32>
    %76 = tpu.matmul %73, %75, %cst_38 {dimension_numbers = #tpu.dot_dimension_numbers<[1], [0], [0], [1], [0, 0, 1, 1], [], []>} : vector<32x32xf32>, vector<32x64xf32>, vector<32x64xf32> -> vector<32x64xf32>
    %c0_39 = arith.constant 0 : index
    %c0_40 = arith.constant 0 : index
    %c0_41 = arith.constant 0 : index
    %77 = vector.load %arg10[%c0_39, %c0_40, %c0_41] : memref<2x1x64xf32, #tpu.memory_space<vmem>>, vector<1x1x64xf32>
    %78 = vector.shape_cast %77 : vector<1x1x64xf32> to vector<1x64xf32>
    %79 = vector.broadcast %78 : vector<1x64xf32> to vector<32x64xf32>
    %80 = arith.addf %76, %79 : vector<32x64xf32>
    %cst_42 = arith.constant 0.000000e+00 : f32
    %81 = vector.broadcast %cst_42 : f32 to vector<32x64xf32>
    %82 = arith.maximumf %80, %81 : vector<32x64xf32>
    %c0_43 = arith.constant 0 : index
    %c0_44 = arith.constant 0 : index
    %c0_45 = arith.constant 0 : index
    %83 = vector.load %arg11[%c0_43, %c0_44, %c0_45] : memref<2x64x32xf32, #tpu.memory_space<vmem>>, vector<1x64x32xf32>
    %84 = vector.shape_cast %83 : vector<1x64x32xf32> to vector<64x32xf32>
    %cst_46 = arith.constant dense<0.000000e+00> : vector<32x32xf32>
    %85 = tpu.matmul %82, %84, %cst_46 {dimension_numbers = #tpu.dot_dimension_numbers<[1], [0], [0], [1], [0, 0, 1, 1], [], []>} : vector<32x64xf32>, vector<64x32xf32>, vector<32x32xf32> -> vector<32x32xf32>
    %c0_47 = arith.constant 0 : index
    %c0_48 = arith.constant 0 : index
    %c0_49 = arith.constant 0 : index
    %86 = vector.load %arg12[%c0_47, %c0_48, %c0_49] : memref<2x1x32xf32, #tpu.memory_space<vmem>>, vector<1x1x32xf32>
    %87 = vector.shape_cast %86 : vector<1x1x32xf32> to vector<1x32xf32>
    %88 = vector.broadcast %87 : vector<1x32xf32> to vector<32x32xf32>
    %89 = arith.addf %85, %88 : vector<32x32xf32>
    %90 = arith.addf %73, %89 : vector<32x32xf32>
    %cst_50 = arith.constant dense<0.000000e+00> : vector<32xf32>
    %91 = vector.multi_reduction <add>, %90, %cst_50 [1] : vector<32x32xf32> to vector<32xf32>
    %92 = vector.shape_cast %91 : vector<32xf32> to vector<32x1xf32>
    %cst_51 = arith.constant 3.125000e-02 : f32
    %93 = vector.broadcast %cst_51 : f32 to vector<32x1xf32>
    %94 = arith.mulf %92, %93 : vector<32x1xf32>
    %95 = arith.mulf %90, %90 : vector<32x32xf32>
    %cst_52 = arith.constant dense<0.000000e+00> : vector<32xf32>
    %96 = vector.multi_reduction <add>, %95, %cst_52 [1] : vector<32x32xf32> to vector<32xf32>
    %97 = vector.shape_cast %96 : vector<32xf32> to vector<32x1xf32>
    %cst_53 = arith.constant 3.125000e-02 : f32
    %98 = vector.broadcast %cst_53 : f32 to vector<32x1xf32>
    %99 = arith.mulf %97, %98 : vector<32x1xf32>
    %100 = arith.mulf %94, %94 : vector<32x1xf32>
    %101 = arith.subf %99, %100 : vector<32x1xf32>
    %102 = vector.broadcast %94 : vector<32x1xf32> to vector<32x32xf32>
    %103 = arith.subf %90, %102 : vector<32x32xf32>
    %cst_54 = arith.constant 9.99999974E-6 : f32
    %104 = vector.broadcast %cst_54 : f32 to vector<32x1xf32>
    %105 = arith.addf %101, %104 : vector<32x1xf32>
    %106 = math.rsqrt %105 : vector<32x1xf32>
    %107 = vector.broadcast %106 : vector<32x1xf32> to vector<32x32xf32>
    %108 = arith.mulf %103, %107 : vector<32x32xf32>
    %c0_55 = arith.constant 0 : index
    %c0_56 = arith.constant 0 : index
    %c0_57 = arith.constant 0 : index
    %109 = vector.load %arg13[%c0_55, %c0_56, %c0_57] : memref<2x1x32xf32, #tpu.memory_space<vmem>>, vector<1x1x32xf32>
    %110 = vector.shape_cast %109 : vector<1x1x32xf32> to vector<1x32xf32>
    %111 = vector.broadcast %110 : vector<1x32xf32> to vector<32x32xf32>
    %112 = arith.mulf %108, %111 : vector<32x32xf32>
    %c0_58 = arith.constant 0 : index
    %c0_59 = arith.constant 0 : index
    %c0_60 = arith.constant 0 : index
    %113 = vector.load %arg14[%c0_58, %c0_59, %c0_60] : memref<2x1x32xf32, #tpu.memory_space<vmem>>, vector<1x1x32xf32>
    %114 = vector.shape_cast %113 : vector<1x1x32xf32> to vector<1x32xf32>
    %115 = vector.broadcast %114 : vector<1x32xf32> to vector<32x32xf32>
    %116 = arith.addf %112, %115 : vector<32x32xf32>
    %c1 = arith.constant 1 : index
    %c0_61 = arith.constant 0 : index
    %c0_62 = arith.constant 0 : index
    %117 = vector.load %arg3[%c1, %c0_61, %c0_62] : memref<2x32x96xf32, #tpu.memory_space<vmem>>, vector<1x32x96xf32>
    %118 = vector.shape_cast %117 : vector<1x32x96xf32> to vector<32x96xf32>
    %cst_63 = arith.constant dense<0.000000e+00> : vector<32x96xf32>
    %119 = tpu.matmul %116, %118, %cst_63 {dimension_numbers = #tpu.dot_dimension_numbers<[1], [0], [0], [1], [0, 0, 1, 1], [], []>} : vector<32x32xf32>, vector<32x96xf32>, vector<32x96xf32> -> vector<32x96xf32>
    %c1_64 = arith.constant 1 : index
    %c0_65 = arith.constant 0 : index
    %c0_66 = arith.constant 0 : index
    %120 = vector.load %arg4[%c1_64, %c0_65, %c0_66] : memref<2x1x96xf32, #tpu.memory_space<vmem>>, vector<1x1x96xf32>
    %121 = vector.shape_cast %120 : vector<1x1x96xf32> to vector<1x96xf32>
    %122 = vector.broadcast %121 : vector<1x96xf32> to vector<32x96xf32>
    %123 = arith.addf %119, %122 : vector<32x96xf32>
    %124 = vector.extract_strided_slice %123 {offsets = [0, 0], sizes = [32, 16], strides = [1, 1]} : vector<32x96xf32> to vector<32x16xf32>
    %125 = vector.extract_strided_slice %123 {offsets = [0, 32], sizes = [32, 16], strides = [1, 1]} : vector<32x96xf32> to vector<32x16xf32>
    %126 = vector.extract_strided_slice %123 {offsets = [0, 64], sizes = [32, 16], strides = [1, 1]} : vector<32x96xf32> to vector<32x16xf32>
    %cst_67 = arith.constant dense<0.000000e+00> : vector<32x32xf32>
    %127 = tpu.matmul %124, %125, %cst_67 {dimension_numbers = #tpu.dot_dimension_numbers<[1], [1], [0], [0], [0, 0, 1, 0], [], []>} : vector<32x16xf32>, vector<32x16xf32>, vector<32x32xf32> -> vector<32x32xf32>
    %128 = arith.addf %127, %0 : vector<32x32xf32>
    %cst_68 = arith.constant dense<0xFF800000> : vector<32xf32>
    %129 = vector.multi_reduction <maximumf>, %128, %cst_68 [1] : vector<32x32xf32> to vector<32xf32>
    %130 = vector.shape_cast %129 : vector<32xf32> to vector<32x1xf32>
    %131 = vector.broadcast %130 : vector<32x1xf32> to vector<32x32xf32>
    %132 = arith.subf %128, %131 : vector<32x32xf32>
    %133 = math.exp %132 : vector<32x32xf32>
    %cst_69 = arith.constant dense<0.000000e+00> : vector<32xf32>
    %134 = vector.multi_reduction <add>, %133, %cst_69 [1] : vector<32x32xf32> to vector<32xf32>
    %135 = vector.shape_cast %134 : vector<32xf32> to vector<32x1xf32>
    %136 = vector.broadcast %135 : vector<32x1xf32> to vector<32x32xf32>
    %137 = arith.divf %133, %136 : vector<32x32xf32>
    %cst_70 = arith.constant dense<0.000000e+00> : vector<32x16xf32>
    %138 = tpu.matmul %137, %126, %cst_70 {dimension_numbers = #tpu.dot_dimension_numbers<[1], [0], [0], [1], [0, 0, 1, 1], [], []>} : vector<32x32xf32>, vector<32x16xf32>, vector<32x16xf32> -> vector<32x16xf32>
    %139 = vector.extract_strided_slice %123 {offsets = [0, 16], sizes = [32, 16], strides = [1, 1]} : vector<32x96xf32> to vector<32x16xf32>
    %140 = vector.extract_strided_slice %123 {offsets = [0, 48], sizes = [32, 16], strides = [1, 1]} : vector<32x96xf32> to vector<32x16xf32>
    %141 = vector.extract_strided_slice %123 {offsets = [0, 80], sizes = [32, 16], strides = [1, 1]} : vector<32x96xf32> to vector<32x16xf32>
    %cst_71 = arith.constant dense<0.000000e+00> : vector<32x32xf32>
    %142 = tpu.matmul %139, %140, %cst_71 {dimension_numbers = #tpu.dot_dimension_numbers<[1], [1], [0], [0], [0, 0, 1, 0], [], []>} : vector<32x16xf32>, vector<32x16xf32>, vector<32x32xf32> -> vector<32x32xf32>
    %143 = arith.addf %142, %0 : vector<32x32xf32>
    %cst_72 = arith.constant dense<0xFF800000> : vector<32xf32>
    %144 = vector.multi_reduction <maximumf>, %143, %cst_72 [1] : vector<32x32xf32> to vector<32xf32>
    %145 = vector.shape_cast %144 : vector<32xf32> to vector<32x1xf32>
    %146 = vector.broadcast %145 : vector<32x1xf32> to vector<32x32xf32>
    %147 = arith.subf %143, %146 : vector<32x32xf32>
    %148 = math.exp %147 : vector<32x32xf32>
    %cst_73 = arith.constant dense<0.000000e+00> : vector<32xf32>
    %149 = vector.multi_reduction <add>, %148, %cst_73 [1] : vector<32x32xf32> to vector<32xf32>
    %150 = vector.shape_cast %149 : vector<32xf32> to vector<32x1xf32>
    %151 = vector.broadcast %150 : vector<32x1xf32> to vector<32x32xf32>
    %152 = arith.divf %148, %151 : vector<32x32xf32>
    %cst_74 = arith.constant dense<0.000000e+00> : vector<32x16xf32>
    %153 = tpu.matmul %152, %141, %cst_74 {dimension_numbers = #tpu.dot_dimension_numbers<[1], [0], [0], [1], [0, 0, 1, 1], [], []>} : vector<32x32xf32>, vector<32x16xf32>, vector<32x16xf32> -> vector<32x16xf32>
    %154 = tpu.concatenate %138, %153 in 1 : vector<32x16xf32>, vector<32x16xf32> -> vector<32x32xf32>
    %c1_75 = arith.constant 1 : index
    %c0_76 = arith.constant 0 : index
    %c0_77 = arith.constant 0 : index
    %155 = vector.load %arg5[%c1_75, %c0_76, %c0_77] : memref<2x32x32xf32, #tpu.memory_space<vmem>>, vector<1x32x32xf32>
    %156 = vector.shape_cast %155 : vector<1x32x32xf32> to vector<32x32xf32>
    %cst_78 = arith.constant dense<0.000000e+00> : vector<32x32xf32>
    %157 = tpu.matmul %154, %156, %cst_78 {dimension_numbers = #tpu.dot_dimension_numbers<[1], [0], [0], [1], [0, 0, 1, 1], [], []>} : vector<32x32xf32>, vector<32x32xf32>, vector<32x32xf32> -> vector<32x32xf32>
    %c1_79 = arith.constant 1 : index
    %c0_80 = arith.constant 0 : index
    %c0_81 = arith.constant 0 : index
    %158 = vector.load %arg6[%c1_79, %c0_80, %c0_81] : memref<2x1x32xf32, #tpu.memory_space<vmem>>, vector<1x1x32xf32>
    %159 = vector.shape_cast %158 : vector<1x1x32xf32> to vector<1x32xf32>
    %160 = vector.broadcast %159 : vector<1x32xf32> to vector<32x32xf32>
    %161 = arith.addf %157, %160 : vector<32x32xf32>
    %162 = arith.addf %116, %161 : vector<32x32xf32>
    %cst_82 = arith.constant dense<0.000000e+00> : vector<32xf32>
    %163 = vector.multi_reduction <add>, %162, %cst_82 [1] : vector<32x32xf32> to vector<32xf32>
    %164 = vector.shape_cast %163 : vector<32xf32> to vector<32x1xf32>
    %cst_83 = arith.constant 3.125000e-02 : f32
    %165 = vector.broadcast %cst_83 : f32 to vector<32x1xf32>
    %166 = arith.mulf %164, %165 : vector<32x1xf32>
    %167 = arith.mulf %162, %162 : vector<32x32xf32>
    %cst_84 = arith.constant dense<0.000000e+00> : vector<32xf32>
    %168 = vector.multi_reduction <add>, %167, %cst_84 [1] : vector<32x32xf32> to vector<32xf32>
    %169 = vector.shape_cast %168 : vector<32xf32> to vector<32x1xf32>
    %cst_85 = arith.constant 3.125000e-02 : f32
    %170 = vector.broadcast %cst_85 : f32 to vector<32x1xf32>
    %171 = arith.mulf %169, %170 : vector<32x1xf32>
    %172 = arith.mulf %166, %166 : vector<32x1xf32>
    %173 = arith.subf %171, %172 : vector<32x1xf32>
    %174 = vector.broadcast %166 : vector<32x1xf32> to vector<32x32xf32>
    %175 = arith.subf %162, %174 : vector<32x32xf32>
    %cst_86 = arith.constant 9.99999974E-6 : f32
    %176 = vector.broadcast %cst_86 : f32 to vector<32x1xf32>
    %177 = arith.addf %173, %176 : vector<32x1xf32>
    %178 = math.rsqrt %177 : vector<32x1xf32>
    %179 = vector.broadcast %178 : vector<32x1xf32> to vector<32x32xf32>
    %180 = arith.mulf %175, %179 : vector<32x32xf32>
    %c1_87 = arith.constant 1 : index
    %c0_88 = arith.constant 0 : index
    %c0_89 = arith.constant 0 : index
    %181 = vector.load %arg7[%c1_87, %c0_88, %c0_89] : memref<2x1x32xf32, #tpu.memory_space<vmem>>, vector<1x1x32xf32>
    %182 = vector.shape_cast %181 : vector<1x1x32xf32> to vector<1x32xf32>
    %183 = vector.broadcast %182 : vector<1x32xf32> to vector<32x32xf32>
    %184 = arith.mulf %180, %183 : vector<32x32xf32>
    %c1_90 = arith.constant 1 : index
    %c0_91 = arith.constant 0 : index
    %c0_92 = arith.constant 0 : index
    %185 = vector.load %arg8[%c1_90, %c0_91, %c0_92] : memref<2x1x32xf32, #tpu.memory_space<vmem>>, vector<1x1x32xf32>
    %186 = vector.shape_cast %185 : vector<1x1x32xf32> to vector<1x32xf32>
    %187 = vector.broadcast %186 : vector<1x32xf32> to vector<32x32xf32>
    %188 = arith.addf %184, %187 : vector<32x32xf32>
    %c1_93 = arith.constant 1 : index
    %c0_94 = arith.constant 0 : index
    %c0_95 = arith.constant 0 : index
    %189 = vector.load %arg9[%c1_93, %c0_94, %c0_95] : memref<2x32x64xf32, #tpu.memory_space<vmem>>, vector<1x32x64xf32>
    %190 = vector.shape_cast %189 : vector<1x32x64xf32> to vector<32x64xf32>
    %cst_96 = arith.constant dense<0.000000e+00> : vector<32x64xf32>
    %191 = tpu.matmul %188, %190, %cst_96 {dimension_numbers = #tpu.dot_dimension_numbers<[1], [0], [0], [1], [0, 0, 1, 1], [], []>} : vector<32x32xf32>, vector<32x64xf32>, vector<32x64xf32> -> vector<32x64xf32>
    %c1_97 = arith.constant 1 : index
    %c0_98 = arith.constant 0 : index
    %c0_99 = arith.constant 0 : index
    %192 = vector.load %arg10[%c1_97, %c0_98, %c0_99] : memref<2x1x64xf32, #tpu.memory_space<vmem>>, vector<1x1x64xf32>
    %193 = vector.shape_cast %192 : vector<1x1x64xf32> to vector<1x64xf32>
    %194 = vector.broadcast %193 : vector<1x64xf32> to vector<32x64xf32>
    %195 = arith.addf %191, %194 : vector<32x64xf32>
    %cst_100 = arith.constant 0.000000e+00 : f32
    %196 = vector.broadcast %cst_100 : f32 to vector<32x64xf32>
    %197 = arith.maximumf %195, %196 : vector<32x64xf32>
    %c1_101 = arith.constant 1 : index
    %c0_102 = arith.constant 0 : index
    %c0_103 = arith.constant 0 : index
    %198 = vector.load %arg11[%c1_101, %c0_102, %c0_103] : memref<2x64x32xf32, #tpu.memory_space<vmem>>, vector<1x64x32xf32>
    %199 = vector.shape_cast %198 : vector<1x64x32xf32> to vector<64x32xf32>
    %cst_104 = arith.constant dense<0.000000e+00> : vector<32x32xf32>
    %200 = tpu.matmul %197, %199, %cst_104 {dimension_numbers = #tpu.dot_dimension_numbers<[1], [0], [0], [1], [0, 0, 1, 1], [], []>} : vector<32x64xf32>, vector<64x32xf32>, vector<32x32xf32> -> vector<32x32xf32>
    %c1_105 = arith.constant 1 : index
    %c0_106 = arith.constant 0 : index
    %c0_107 = arith.constant 0 : index
    %201 = vector.load %arg12[%c1_105, %c0_106, %c0_107] : memref<2x1x32xf32, #tpu.memory_space<vmem>>, vector<1x1x32xf32>
    %202 = vector.shape_cast %201 : vector<1x1x32xf32> to vector<1x32xf32>
    %203 = vector.broadcast %202 : vector<1x32xf32> to vector<32x32xf32>
    %204 = arith.addf %200, %203 : vector<32x32xf32>
    %205 = arith.addf %188, %204 : vector<32x32xf32>
    %cst_108 = arith.constant dense<0.000000e+00> : vector<32xf32>
    %206 = vector.multi_reduction <add>, %205, %cst_108 [1] : vector<32x32xf32> to vector<32xf32>
    %207 = vector.shape_cast %206 : vector<32xf32> to vector<32x1xf32>
    %cst_109 = arith.constant 3.125000e-02 : f32
    %208 = vector.broadcast %cst_109 : f32 to vector<32x1xf32>
    %209 = arith.mulf %207, %208 : vector<32x1xf32>
    %210 = arith.mulf %205, %205 : vector<32x32xf32>
    %cst_110 = arith.constant dense<0.000000e+00> : vector<32xf32>
    %211 = vector.multi_reduction <add>, %210, %cst_110 [1] : vector<32x32xf32> to vector<32xf32>
    %212 = vector.shape_cast %211 : vector<32xf32> to vector<32x1xf32>
    %cst_111 = arith.constant 3.125000e-02 : f32
    %213 = vector.broadcast %cst_111 : f32 to vector<32x1xf32>
    %214 = arith.mulf %212, %213 : vector<32x1xf32>
    %215 = arith.mulf %209, %209 : vector<32x1xf32>
    %216 = arith.subf %214, %215 : vector<32x1xf32>
    %217 = vector.broadcast %209 : vector<32x1xf32> to vector<32x32xf32>
    %218 = arith.subf %205, %217 : vector<32x32xf32>
    %cst_112 = arith.constant 9.99999974E-6 : f32
    %219 = vector.broadcast %cst_112 : f32 to vector<32x1xf32>
    %220 = arith.addf %216, %219 : vector<32x1xf32>
    %221 = math.rsqrt %220 : vector<32x1xf32>
    %222 = vector.broadcast %221 : vector<32x1xf32> to vector<32x32xf32>
    %223 = arith.mulf %218, %222 : vector<32x32xf32>
    %c1_113 = arith.constant 1 : index
    %c0_114 = arith.constant 0 : index
    %c0_115 = arith.constant 0 : index
    %224 = vector.load %arg13[%c1_113, %c0_114, %c0_115] : memref<2x1x32xf32, #tpu.memory_space<vmem>>, vector<1x1x32xf32>
    %225 = vector.shape_cast %224 : vector<1x1x32xf32> to vector<1x32xf32>
    %226 = vector.broadcast %225 : vector<1x32xf32> to vector<32x32xf32>
    %227 = arith.mulf %223, %226 : vector<32x32xf32>
    %c1_116 = arith.constant 1 : index
    %c0_117 = arith.constant 0 : index
    %c0_118 = arith.constant 0 : index
    %228 = vector.load %arg14[%c1_116, %c0_117, %c0_118] : memref<2x1x32xf32, #tpu.memory_space<vmem>>, vector<1x1x32xf32>
    %229 = vector.shape_cast %228 : vector<1x1x32xf32> to vector<1x32xf32>
    %230 = vector.broadcast %229 : vector<1x32xf32> to vector<32x32xf32>
    %231 = arith.addf %227, %230 : vector<32x32xf32>
    %c0_119 = arith.constant 0 : index
    %c0_120 = arith.constant 0 : index
    %232 = vector.load %arg15[%c0_119, %c0_120] : memref<32x32xf32, #tpu.memory_space<vmem>>, vector<32x32xf32>
    %cst_121 = arith.constant dense<0.000000e+00> : vector<32x32xf32>
    %233 = tpu.matmul %231, %232, %cst_121 {dimension_numbers = #tpu.dot_dimension_numbers<[1], [0], [0], [1], [0, 0, 1, 1], [], []>} : vector<32x32xf32>, vector<32x32xf32>, vector<32x32xf32> -> vector<32x32xf32>
    %c0_122 = arith.constant 0 : index
    %c0_123 = arith.constant 0 : index
    %234 = vector.load %arg16[%c0_122, %c0_123] : memref<1x32xf32, #tpu.memory_space<vmem>>, vector<1x32xf32>
    %235 = vector.broadcast %234 : vector<1x32xf32> to vector<32x32xf32>
    %236 = arith.addf %233, %235 : vector<32x32xf32>
    %c0_124 = arith.constant 0 : index
    %c0_125 = arith.constant 0 : index
    %237 = vector.load %arg2[%c0_124, %c0_125] : memref<4x32xf32, #tpu.memory_space<vmem>>, vector<4x32xf32>
    %cst_126 = arith.constant dense<0.000000e+00> : vector<4x32xf32>
    %238 = tpu.matmul %237, %236, %cst_126 {dimension_numbers = #tpu.dot_dimension_numbers<[1], [0], [0], [1], [0, 0, 1, 1], [], []>} : vector<4x32xf32>, vector<32x32xf32>, vector<4x32xf32> -> vector<4x32xf32>
    %239 = arith.mulf %238, %238 : vector<4x32xf32>
    %cst_127 = arith.constant dense<0.000000e+00> : vector<4xf32>
    %240 = vector.multi_reduction <add>, %239, %cst_127 [1] : vector<4x32xf32> to vector<4xf32>
    %241 = vector.shape_cast %240 : vector<4xf32> to vector<4x1xf32>
    %cst_128 = arith.constant 1.000000e-24 : f32
    %242 = vector.broadcast %cst_128 : f32 to vector<4x1xf32>
    %243 = arith.maximumf %241, %242 : vector<4x1xf32>
    %244 = math.rsqrt %243 : vector<4x1xf32>
    %245 = vector.broadcast %244 : vector<4x1xf32> to vector<4x32xf32>
    %246 = arith.mulf %238, %245 : vector<4x32xf32>
    %c0_129 = arith.constant 0 : index
    %c0_130 = arith.constant 0 : index
    %247 = vector.load %arg17[%c0_129, %c0_130] : memref<4x32xf32, #tpu.memory_space<vmem>>, vector<4x32xf32>
    tpu.vector_store %arg17[%c0_129, %c0_130], %246 {strides = array<i32>} : memref<4x32xf32, #tpu.memory_space<vmem>>, vector<4x32xf32>,
    return
  }
}

</mosaic_0001>

<llo_original>
// kernel: forward.1
$region0: #{forward.1}
  #allocation0 [shape = 'u32[]', space=smem, size = 0x4, offset = 0x4, fixed_abs, tag = 'smem constant byte address 0x4 - core index']
  #allocation1 [shape = 'u32[144,128]{1,0:T(1,128)}', space=vmem, size = 0x12000, scoped, tag = 'internal scratch']
  %s0 = inlined_call_operand.vmem [shape: f32[32,32], index: 0, kind: input, shape index: {}]
  %s1 = inlined_call_operand.vmem [shape: f32[32,32], index: 1, kind: input, shape index: {}]
  %s2 = inlined_call_operand.vmem [shape: f32[4,32], index: 2, kind: input, shape index: {}]
  %s3 = inlined_call_operand.vmem [shape: f32[2,32,96], index: 3, kind: input, shape index: {}]
  %s4 = inlined_call_operand.vmem [shape: f32[2,1,96], index: 4, kind: input, shape index: {}]
  %s5 = inlined_call_operand.vmem [shape: f32[2,32,32], index: 5, kind: input, shape index: {}]
  %s6 = inlined_call_operand.vmem [shape: f32[2,1,32], index: 6, kind: input, shape index: {}]
  %s7 = inlined_call_operand.vmem [shape: f32[2,1,32], index: 7, kind: input, shape index: {}, may-alias: {7,13}]
  %s8 = inlined_call_operand.vmem [shape: f32[2,1,32], index: 8, kind: input, shape index: {}, may-alias: {8,14}]
  %s9 = inlined_call_operand.vmem [shape: f32[2,32,64], index: 9, kind: input, shape index: {}]
  %s10 = inlined_call_operand.vmem [shape: f32[2,1,64], index: 10, kind: input, shape index: {}]
  %s11 = inlined_call_operand.vmem [shape: f32[2,64,32], index: 11, kind: input, shape index: {}]
  %s12 = inlined_call_operand.vmem [shape: f32[2,1,32], index: 12, kind: input, shape index: {}]
  %s13 = inlined_call_operand.vmem [shape: f32[2,1,32], index: 13, kind: input, shape index: {}, may-alias: {7,13}]
  %s14 = inlined_call_operand.vmem [shape: f32[2,1,32], index: 14, kind: input, shape index: {}, may-alias: {8,14}]
  %s15 = inlined_call_operand.vmem [shape: f32[32,32], index: 15, kind: input, shape index: {}]
  %s16 = inlined_call_operand.vmem [shape: f32[1,32], index: 16, kind: input, shape index: {}]
  %s17 = inlined_call_operand.vmem [shape: f32[4,32], index: 17, kind: output, shape index: {}]
  %s18 = sld [smem:[#allocation0]]
  $region78: #{forward.1} parent=0
    _
  %s20 = ssub.s32 1, %s18
  %s21 = scalar_select 0, %s20, %s18
  // Predicated region
  $region2: #{forward.1} parent=0 // pred_check
    _
  $region3: #{forward.1} parent=0 // pred_check_branch
    %23 = sbr.rel (0) target = $region5
  $region4: #{forward.1} parent=0 // pred_region
    _
  $region5: #{forward.1} parent=0 // pred_fallthru
    _
  // Predicated region
  $region6: #{forward.1} parent=0 // pred_check
    _
  $region7: #{forward.1} parent=0 // pred_check_branch
    %25 = sbr.rel (0) target = $region9
  $region8: #{forward.1} parent=0 // pred_region
    _
  $region9: #{forward.1} parent=0 // pred_fallthru
    _
  // Predicated region
  $region10: #{forward.1} parent=0 // pred_check
    _
  $region11: #{forward.1} parent=0 // pred_check_branch
    %27 = sbr.rel (0) target = $region13
  $region12: #{forward.1} parent=0 // pred_region
    _
  $region13: #{forward.1} parent=0 // pred_fallthru
    _
  // Predicated region
  $region14: #{forward.1} parent=0 // pred_check
    _
  $region15: #{forward.1} parent=0 // pred_check_branch
    %29 = sbr.rel (0) target = $region17
  $region16: #{forward.1} parent=0 // pred_region
    _
  $region17: #{forward.1} parent=0 // pred_fallthru
    _
  // Predicated region
  $region18: #{forward.1} parent=0 // pred_check
    _
  $region19: #{forward.1} parent=0 // pred_check_branch
    %31 = sbr.rel (0) target = $region21
  $region20: #{forward.1} parent=0 // pred_region
    _
  $region21: #{forward.1} parent=0 // pred_fallthru
    _
  // Predicated region
  $region22: #{forward.1} parent=0 // pred_check
    _
  $region23: #{forward.1} parent=0 // pred_check_branch
    %33 = sbr.rel (0) target = $region25
  $region24: #{forward.1} parent=0 // pred_region
    _
  $region25: #{forward.1} parent=0 // pred_fallthru
    _
  // Predicated region
  $region26: #{forward.1} parent=0 // pred_check
    _
  $region27: #{forward.1} parent=0 // pred_check_branch
    %35 = sbr.rel (0) target = $region29
  $region28: #{forward.1} parent=0 // pred_region
    _
  $region29: #{forward.1} parent=0 // pred_fallthru
    _
  // Predicated region
  $region30: #{forward.1} parent=0 // pred_check
    _
  $region31: #{forward.1} parent=0 // pred_check_branch
    %37 = sbr.rel (0) target = $region33
  $region32: #{forward.1} parent=0 // pred_region
    _
  $region33: #{forward.1} parent=0 // pred_fallthru
    _
  // Predicated region
  $region34: #{forward.1} parent=0 // pred_check
    _
  $region35: #{forward.1} parent=0 // pred_check_branch
    %39 = sbr.rel (0) target = $region37
  $region36: #{forward.1} parent=0 // pred_region
    _
  $region37: #{forward.1} parent=0 // pred_fallthru
    _
  // Predicated region
  $region38: #{forward.1} parent=0 // pred_check
    _
  $region39: #{forward.1} parent=0 // pred_check_branch
    %41 = sbr.rel (0) target = $region41
  $region40: #{forward.1} parent=0 // pred_region
    _
  $region41: #{forward.1} parent=0 // pred_fallthru
    _
  // Predicated region
  $region42: #{forward.1} parent=0 // pred_check
    _
  $region43: #{forward.1} parent=0 // pred_check_branch
    %43 = sbr.rel (0) target = $region45
  $region44: #{forward.1} parent=0 // pred_region
    _
  $region45: #{forward.1} parent=0 // pred_fallthru
    _
  // Predicated region
  $region46: #{forward.1} parent=0 // pred_check
    _
  $region47: #{forward.1} parent=0 // pred_check_branch
    %45 = sbr.rel (0) target = $region49
  $region48: #{forward.1} parent=0 // pred_region
    _
  $region49: #{forward.1} parent=0 // pred_fallthru
    _
  // Predicated region
  $region50: #{forward.1} parent=0 // pred_check
    _
  $region51: #{forward.1} parent=0 // pred_check_branch
    %47 = sbr.rel (0) target = $region53
  $region52: #{forward.1} parent=0 // pred_region
    _
  $region53: #{forward.1} parent=0 // pred_fallthru
    _
  // Predicated region
  $region54: #{forward.1} parent=0 // pred_check
    _
  $region55: #{forward.1} parent=0 // pred_check_branch
    %49 = sbr.rel (0) target = $region57
  $region56: #{forward.1} parent=0 // pred_region
    _
  $region57: #{forward.1} parent=0 // pred_fallthru
    _
  // Predicated region
  $region58: #{forward.1} parent=0 // pred_check
    _
  $region59: #{forward.1} parent=0 // pred_check_branch
    %51 = sbr.rel (0) target = $region61
  $region60: #{forward.1} parent=0 // pred_region
    _
  $region61: #{forward.1} parent=0 // pred_fallthru
    _
  // Predicated region
  $region62: #{forward.1} parent=0 // pred_check
    _
  $region63: #{forward.1} parent=0 // pred_check_branch
    %53 = sbr.rel (0) target = $region65
  $region64: #{forward.1} parent=0 // pred_region
    _
  $region65: #{forward.1} parent=0 // pred_fallthru
    _
  // Predicated region
  $region66: #{forward.1} parent=0 // pred_check
    _
  $region67: #{forward.1} parent=0 // pred_check_branch
    %55 = sbr.rel (0) target = $region69
  $region68: #{forward.1} parent=0 // pred_region
    _
  $region69: #{forward.1} parent=0 // pred_fallthru
    _
  %v56 = vld [vmem:[%s1] sm:$0xff]
  %v57 = vld [vmem:[%s1 + $0x8] sm:$0xff]
  %v58 = vld [vmem:[%s1 + $0x10] sm:$0xff]
  %v59 = vld [vmem:[%s1 + $0x18] sm:$0xff]
  %v60 = vld [vmem:[%s0] sm:$0xff]
  %v61 = vld [vmem:[%s0 + $0x8] sm:$0xff]
  %v62 = vld [vmem:[%s0 + $0x10] sm:$0xff]
  %v63 = vld [vmem:[%s0 + $0x18] sm:$0xff]
  %v64 = vld [vmem:[%s3] sm:$0xff]
  %v65 = vld [vmem:[%s3 + $0x8] sm:$0xff]
  %v66 = vld [vmem:[%s3 + $0x10] sm:$0xff]
  %v67 = vld [vmem:[%s3 + $0x18] sm:$0xff]
  %v68 = vld [vmem:[%s4] sm:$0x1]
  %v70 = vlaneseq
  %v71 = vshrl.u32 %v70, 7
  %v72 = vsub.s32 0, %v71
  %v73 = vrot.slane %v68, %v72
  %vm75 = vcmask 261120
  %v77 = vsel %vm75, %v60, 0
  %v80 = vsel %vm75, %v61, 0
  %v83 = vsel %vm75, %v62, 0
  %v86 = vsel %vm75, %v63, 0
  %88 = vmatprep.subr.mxu0 0.0
  %89 = vmatpush1.msra.mxu0 %v64
  %90 = vmatprep.subr.mxu0 0.0
  %91 = vmatpush1.msra.mxu0 %v65
  %92 = vmatprep.subr.mxu0 0.0
  %93 = vmatpush1.msra.mxu0 %v66
  %94 = vmatprep.subr.mxu0 0.0
  %95 = vmatpush1.msra.mxu0 %v67
  %96 = vmatprep.subr.mxu0 0.0
  %97 = vmatpush1.msra.mxu0 0.0
  %98 = vmatprep.subr.mxu0 0.0
  %99 = vmatpush1.msra.mxu0 0.0
  %100 = vmatprep.subr.mxu0 0.0
  %101 = vmatpush1.msra.mxu0 0.0
  %102 = vmatprep.subr.mxu0 0.0
  %103 = vmatpush1.msra.mxu0 0.0
  %104 = vmatprep.subr.mxu0 0.0
  %105 = vmatpush1.msra.mxu0 0.0
  %106 = vmatprep.subr.mxu0 0.0
  %107 = vmatpush1.msra.mxu0 0.0
  %108 = vmatprep.subr.mxu0 0.0
  %109 = vmatpush1.msra.mxu0 0.0
  %110 = vmatprep.subr.mxu0 0.0
  %111 = vmatpush1.msra.mxu0 0.0
  %112 = vmatprep.subr.mxu0 0.0
  %113 = vmatpush1.msra.mxu0 0.0
  %114 = vmatprep.subr.mxu0 0.0
  %115 = vmatpush1.msra.mxu0 0.0
  %116 = vmatprep.subr.mxu0 0.0
  %117 = vmatpush1.msra.mxu0 0.0
  %118 = vmatprep.subr.mxu0 0.0
  %119 = vmatpush1.msra.mxu0 0.0
  %120 = vmatprep.subr.mxu0 0.0
  %121 = vmatpush1.msra.mxu0 0.0
  %122 = vmatprep.subr.mxu0 0.0
  %123 = vmatpush1.msra.mxu0 0.0
  %124 = vmatprep.subr.mxu0 0.0
  %125 = vmatpush1.msra.mxu0 0.0
  %126 = vmatprep.subr.mxu0 0.0
  %127 = vmatpush1.msra.mxu0 0.0
  %128 = vmatprep.subr.mxu0 0.0
  %129 = vmatpush1.msra.mxu0 0.0
  %130 = vmatprep.subr.mxu0 0.0
  %131 = vmatpush1.msra.mxu0 0.0
  %132 = vmatprep.subr.mxu0 0.0
  %133 = vmatpush1.msra.mxu0 0.0
  %134 = vmatprep.subr.mxu0 0.0
  %135 = vmatpush1.msra.mxu0 0.0
  %136 = vmatprep.subr.mxu0 0.0
  %137 = vmatpush1.msra.mxu0 0.0
  %138 = vmatprep.subr.mxu0 0.0
  %139 = vmatpush1.msra.mxu0 0.0
  %140 = vmatprep.subr.mxu0 0.0
  %141 = vmatpush1.msra.mxu0 0.0
  %142 = vmatprep.subr.mxu0 0.0
  %143 = vmatpush1.msra.mxu0 0.0
  %144 = vmatprep.subr.mxu0 0.0
  %145 = vmatpush1.msra.mxu0 0.0
  %146 = vmatprep.subr.mxu0 0.0
  %147 = vmatpush1.msra.mxu0 0.0
  %148 = vmatprep.subr.mxu0 0.0
  %149 = vmatpush1.msra.mxu0 0.0
  %150 = vmatprep.subr.mxu0 0.0
  %151 = vmatpush1.msra.mxu0 0.0
  %152 = vmatprep.mubr.f32.mxu0 0.0
  %153 = vmatmul.mubr.f32.gmra.mrb[0].mxu0 %v77
  %v154 = vpop.f32.mrb[0].mxu0
  %v155 = vadd.f32 %v73, %v154
  %v156 = vpop.f32.mrb[0].mxu0
  %157 = vmatprep.mubr.f32.mxu0 0.0
  %158 = vmatmul.mubr.f32.gmra.mrb[0].mxu0 %v80
  %v159 = vpop.f32.mrb[0].mxu0
  %v160 = vadd.f32 %v73, %v159
  %v161 = vpop.f32.mrb[0].mxu0
  %162 = vmatprep.mubr.f32.mxu0 0.0
  %163 = vmatmul.mubr.f32.gmra.mrb[0].mxu0 %v83
  %v164 = vpop.f32.mrb[0].mxu0
  %v165 = vadd.f32 %v73, %v164
  %v166 = vpop.f32.mrb[0].mxu0
  %167 = vmatprep.mubr.f32.mxu0 0.0
  %168 = vmatmul.mubr.f32.gmra.mrb[0].mxu0 %v86
  %v169 = vpop.f32.mrb[0].mxu0
  %v170 = vadd.f32 %v73, %v169
  %v171 = vpop.f32.mrb[0].mxu0
  %172 = vdwg.mxu0
  %177 = vrot.lane.b32.xlu0 %v155, 96
  %v178 = vpop.permute.xlu0 %177
  %179 = vrot.lane.b32.xlu0 %v160, 96
  %v180 = vpop.permute.xlu0 %179
  %181 = vrot.lane.b32.xlu0 %v165, 96
  %v182 = vpop.permute.xlu0 %181
  %183 = vrot.lane.b32.xlu0 %v170, 96
  %v184 = vpop.permute.xlu0 %183
  %vm185 = vcmask 130048
  %v186 = vsel %vm185, %v155, 0
  %v188 = vsel %vm185, %v160, 0
  %v190 = vsel %vm185, %v165, 0
  %v192 = vsel %vm185, %v170, 0
  %v194 = vsel %vm185, %v178, 0
  %v196 = vsel %vm185, %v180, 0
  %v198 = vsel %vm185, %v182, 0
  %v200 = vsel %vm185, %v184, 0
  %202 = vmatprep.subr.mxu0 0.0
  %203 = vmatpush1.xpose.msra.mxu0 %v194
  %204 = vmatprep.subr.mxu0 0.0
  %205 = vmatpush1.xpose.msra.mxu0 %v196
  %206 = vmatprep.subr.mxu0 0.0
  %207 = vmatpush1.xpose.msra.mxu0 %v198
  %208 = vmatprep.subr.mxu0 0.0
  %209 = vmatpush1.xpose.msra.mxu0 %v200
  %210 = vmatprep.subr.mxu0 0.0
  %211 = vmatpush1.xpose.msra.mxu0 0.0
  %212 = vmatprep.subr.mxu0 0.0
  %213 = vmatpush1.xpose.msra.mxu0 0.0
  %214 = vmatprep.subr.mxu0 0.0
  %215 = vmatpush1.xpose.msra.mxu0 0.0
  %216 = vmatprep.subr.mxu0 0.0
  %217 = vmatpush1.xpose.msra.mxu0 0.0
  %218 = vmatprep.subr.mxu0 0.0
  %219 = vmatpush1.xpose.msra.mxu0 0.0
  %220 = vmatprep.subr.mxu0 0.0
  %221 = vmatpush1.xpose.msra.mxu0 0.0
  %222 = vmatprep.subr.mxu0 0.0
  %223 = vmatpush1.xpose.msra.mxu0 0.0
  %224 = vmatprep.subr.mxu0 0.0
  %225 = vmatpush1.xpose.msra.mxu0 0.0
  %226 = vmatprep.subr.mxu0 0.0
  %227 = vmatpush1.xpose.msra.mxu0 0.0
  %228 = vmatprep.subr.mxu0 0.0
  %229 = vmatpush1.xpose.msra.mxu0 0.0
  %230 = vmatprep.subr.mxu0 0.0
  %231 = vmatpush1.xpose.msra.mxu0 0.0
  %232 = vmatprep.subr.mxu0 0.0
  %233 = vmatpush1.xpose.msra.mxu0 0.0
  %234 = vmatprep.subr.mxu0 0.0
  %235 = vmatpush1.xpose.msra.mxu0 0.0
  %236 = vmatprep.subr.mxu0 0.0
  %237 = vmatpush1.xpose.msra.mxu0 0.0
  %238 = vmatprep.subr.mxu0 0.0
  %239 = vmatpush1.xpose.msra.mxu0 0.0
  %240 = vmatprep.subr.mxu0 0.0
  %241 = vmatpush1.xpose.msra.mxu0 0.0
  %242 = vmatprep.subr.mxu0 0.0
  %243 = vmatpush1.xpose.msra.mxu0 0.0
  %244 = vmatprep.subr.mxu0 0.0
  %245 = vmatpush1.xpose.msra.mxu0 0.0
  %246 = vmatprep.subr.mxu0 0.0
  %247 = vmatpush1.xpose.msra.mxu0 0.0
  %248 = vmatprep.subr.mxu0 0.0
  %249 = vmatpush1.xpose.msra.mxu0 0.0
  %250 = vmatprep.subr.mxu0 0.0
  %251 = vmatpush1.xpose.msra.mxu0 0.0
  %252 = vmatprep.subr.mxu0 0.0
  %253 = vmatpush1.xpose.msra.mxu0 0.0
  %254 = vmatprep.subr.mxu0 0.0
  %255 = vmatpush1.xpose.msra.mxu0 0.0
  %256 = vmatprep.subr.mxu0 0.0
  %257 = vmatpush1.xpose.msra.mxu0 0.0
  %258 = vmatprep.subr.mxu0 0.0
  %259 = vmatpush1.xpose.msra.mxu0 0.0
  %260 = vmatprep.subr.mxu0 0.0
  %261 = vmatpush1.xpose.msra.mxu0 0.0
  %262 = vmatprep.subr.mxu0 0.0
  %263 = vmatpush1.xpose.msra.mxu0 0.0
  %264 = vmatprep.subr.mxu0 0.0
  %265 = vmatpush1.xpose.msra.mxu0 0.0
  %266 = vmatprep.mubr.f32.mxu0 0.0
  %267 = vmatmul.mubr.f32.gmra.mrb[0].mxu0 %v186
  %v268 = vpop.f32.mrb[0].mxu0
  %v269 = vadd.f32 %v56, %v268
  %v270 = vpop.f32.mrb[0].mxu0
  %271 = vmatprep.mubr.f32.mxu0 0.0
  %272 = vmatmul.mubr.f32.gmra.mrb[0].mxu0 %v188
  %v273 = vpop.f32.mrb[0].mxu0
  %v274 = vadd.f32 %v57, %v273
  %v275 = vpop.f32.mrb[0].mxu0
  %276 = vmatprep.mubr.f32.mxu0 0.0
  %277 = vmatmul.mubr.f32.gmra.mrb[0].mxu0 %v190
  %v278 = vpop.f32.mrb[0].mxu0
  %v279 = vadd.f32 %v58, %v278
  %v280 = vpop.f32.mrb[0].mxu0
  %281 = vmatprep.mubr.f32.mxu0 0.0
  %282 = vmatmul.mubr.f32.gmra.mrb[0].mxu0 %v192
  %v283 = vpop.f32.mrb[0].mxu0
  %v284 = vadd.f32 %v59, %v283
  %v285 = vpop.f32.mrb[0].mxu0
  %286 = vdwg.mxu0
  %v287 = vsel %vm75, %v269, -inf
  %288 = vmax.xlane.f32.xlu0 %v287
  %v289 = vpop.xlane.xlu0 %288
  %v290 = vsel %vm75, %v274, -inf
  %291 = vmax.xlane.f32.xlu0 %v290
  %v292 = vpop.xlane.xlu0 %291
  %v293 = vsel %vm75, %v279, -inf
  %294 = vmax.xlane.f32.xlu0 %v293
  %v295 = vpop.xlane.xlu0 %294
  %v296 = vsel %vm75, %v284, -inf
  %297 = vmax.xlane.f32.xlu0 %v296
  %v298 = vpop.xlane.xlu0 %297
  %v299 = vsub.f32 %v269, %v289
  %v300 = vsub.f32 %v274, %v292
  %v301 = vsub.f32 %v279, %v295
  %v302 = vsub.f32 %v284, %v298
  %v303 = vmul.f32 %v299, 1.442695
  %v304 = vpow.pop %v303
  %v305 = vmul.f32 %v300, 1.442695
  %v306 = vpow.pop %v305
  %v307 = vmul.f32 %v301, 1.442695
  %v308 = vpow.pop %v307
  %v309 = vmul.f32 %v302, 1.442695
  %v310 = vpow.pop %v309
  %v311 = vsel %vm75, %v304, 0.0
  %312 = vadd.xlane.f32.xlu0 %v311
  %v313 = vpop.xlane.xlu0 %312
  %v314 = vsel %vm75, %v306, 0.0
  %315 = vadd.xlane.f32.xlu0 %v314
  %v316 = vpop.xlane.xlu0 %315
  %v317 = vsel %vm75, %v308, 0.0
  %318 = vadd.xlane.f32.xlu0 %v317
  %v319 = vpop.xlane.xlu0 %318
  %v320 = vsel %vm75, %v310, 0.0
  %321 = vadd.xlane.f32.xlu0 %v320
  %v322 = vpop.xlane.xlu0 %321
  %v323 = vrcp.pop %v313
  %v324 = vmul.f32 %v304, %v323
  %v325 = vrcp.pop %v316
  %v326 = vmul.f32 %v306, %v325
  %v327 = vrcp.pop %v319
  %v328 = vmul.f32 %v308, %v327
  %v329 = vrcp.pop %v322
  %v330 = vmul.f32 %v310, %v329
  %331 = vrot.lane.b32.xlu0 %v155, 64
  %v332 = vpop.permute.xlu0 %331
  %333 = vrot.lane.b32.xlu0 %v160, 64
  %v334 = vpop.permute.xlu0 %333
  %335 = vrot.lane.b32.xlu0 %v165, 64
  %v336 = vpop.permute.xlu0 %335
  %337 = vrot.lane.b32.xlu0 %v170, 64
  %v338 = vpop.permute.xlu0 %337
  %v344 = vsel %vm75, %v324, 0
  %v347 = vsel %vm75, %v326, 0
  %v350 = vsel %vm75, %v328, 0
  %v353 = vsel %vm75, %v330, 0
  %355 = vmatprep.subr.mxu0 0.0
  %356 = vmatpush1.msra.mxu0 %v332
  %357 = vmatprep.subr.mxu0 0.0
  %358 = vmatpush1.msra.mxu0 %v334
  %359 = vmatprep.subr.mxu0 0.0
  %360 = vmatpush1.msra.mxu0 %v336
  %361 = vmatprep.subr.mxu0 0.0
  %362 = vmatpush1.msra.mxu0 %v338
  %363 = vmatprep.subr.mxu0 0.0
  %364 = vmatpush1.msra.mxu0 0.0
  %365 = vmatprep.subr.mxu0 0.0
  %366 = vmatpush1.msra.mxu0 0.0
  %367 = vmatprep.subr.mxu0 0.0
  %368 = vmatpush1.msra.mxu0 0.0
  %369 = vmatprep.subr.mxu0 0.0
  %370 = vmatpush1.msra.mxu0 0.0
  %371 = vmatprep.subr.mxu0 0.0
  %372 = vmatpush1.msra.mxu0 0.0
  %373 = vmatprep.subr.mxu0 0.0
  %374 = vmatpush1.msra.mxu0 0.0
  %375 = vmatprep.subr.mxu0 0.0
  %376 = vmatpush1.msra.mxu0 0.0
  %377 = vmatprep.subr.mxu0 0.0
  %378 = vmatpush1.msra.mxu0 0.0
  %379 = vmatprep.subr.mxu0 0.0
  %380 = vmatpush1.msra.mxu0 0.0
  %381 = vmatprep.subr.mxu0 0.0
  %382 = vmatpush1.msra.mxu0 0.0
  %383 = vmatprep.subr.mxu0 0.0
  %384 = vmatpush1.msra.mxu0 0.0
  %385 = vmatprep.subr.mxu0 0.0
  %386 = vmatpush1.msra.mxu0 0.0
  %387 = vmatprep.subr.mxu0 0.0
  %388 = vmatpush1.msra.mxu0 0.0
  %389 = vmatprep.subr.mxu0 0.0
  %390 = vmatpush1.msra.mxu0 0.0
  %391 = vmatprep.subr.mxu0 0.0
  %392 = vmatpush1.msra.mxu0 0.0
  %393 = vmatprep.subr.mxu0 0.0
  %394 = vmatpush1.msra.mxu0 0.0
  %395 = vmatprep.subr.mxu0 0.0
  %396 = vmatpush1.msra.mxu0 0.0
  %397 = vmatprep.subr.mxu0 0.0
  %398 = vmatpush1.msra.mxu0 0.0
  %399 = vmatprep.subr.mxu0 0.0
  %400 = vmatpush1.msra.mxu0 0.0
  %401 = vmatprep.subr.mxu0 0.0
  %402 = vmatpush1.msra.mxu0 0.0
  %403 = vmatprep.subr.mxu0 0.0
  %404 = vmatpush1.msra.mxu0 0.0
  %405 = vmatprep.subr.mxu0 0.0
  %406 = vmatpush1.msra.mxu0 0.0
  %407 = vmatprep.subr.mxu0 0.0
  %408 = vmatpush1.msra.mxu0 0.0
  %409 = vmatprep.subr.mxu0 0.0
  %410 = vmatpush1.msra.mxu0 0.0
  %411 = vmatprep.subr.mxu0 0.0
  %412 = vmatpush1.msra.mxu0 0.0
  %413 = vmatprep.subr.mxu0 0.0
  %414 = vmatpush1.msra.mxu0 0.0
  %415 = vmatprep.subr.mxu0 0.0
  %416 = vmatpush1.msra.mxu0 0.0
  %417 = vmatprep.subr.mxu0 0.0
  %418 = vmatpush1.msra.mxu0 0.0
  %419 = vmatprep.mubr.f32.mxu0 0.0
  %420 = vmatmul.mubr.f32.gmra.mrb[0].mxu0 %v344
  %v421 = vpop.f32.mrb[0].mxu0
  %v422 = vadd.f32 0.0, %v421
  %v423 = vpop.f32.mrb[0].mxu0
  %424 = vmatprep.mubr.f32.mxu0 0.0
  %425 = vmatmul.mubr.f32.gmra.mrb[0].mxu0 %v347
  %v426 = vpop.f32.mrb[0].mxu0
  %v427 = vadd.f32 0.0, %v426
  %v428 = vpop.f32.mrb[0].mxu0
  %429 = vmatprep.mubr.f32.mxu0 0.0
  %430 = vmatmul.mubr.f32.gmra.mrb[0].mxu0 %v350
  %v431 = vpop.f32.mrb[0].mxu0
  %v432 = vadd.f32 0.0, %v431
  %v433 = vpop.f32.mrb[0].mxu0
  %434 = vmatprep.mubr.f32.mxu0 0.0
  %435 = vmatmul.mubr.f32.gmra.mrb[0].mxu0 %v353
  %v436 = vpop.f32.mrb[0].mxu0
  %v437 = vadd.f32 0.0, %v436
  %v438 = vpop.f32.mrb[0].mxu0
  %439 = vdwg.mxu0
  %440 = vrot.lane.b32.xlu0 %v155, 112
  %v441 = vpop.permute.xlu0 %440
  %442 = vrot.lane.b32.xlu0 %v160, 112
  %v443 = vpop.permute.xlu0 %442
  %444 = vrot.lane.b32.xlu0 %v165, 112
  %v445 = vpop.permute.xlu0 %444
  %446 = vrot.lane.b32.xlu0 %v170, 112
  %v447 = vpop.permute.xlu0 %446
  %448 = vrot.lane.b32.xlu0 %v155, 80
  %v449 = vpop.permute.xlu0 %448
  %450 = vrot.lane.b32.xlu0 %v160, 80
  %v451 = vpop.permute.xlu0 %450
  %452 = vrot.lane.b32.xlu0 %v165, 80
  %v453 = vpop.permute.xlu0 %452
  %454 = vrot.lane.b32.xlu0 %v170, 80
  %v455 = vpop.permute.xlu0 %454
  %v456 = vsel %vm185, %v441, 0
  %v458 = vsel %vm185, %v443, 0
  %v460 = vsel %vm185, %v445, 0
  %v462 = vsel %vm185, %v447, 0
  %v464 = vsel %vm185, %v449, 0
  %v466 = vsel %vm185, %v451, 0
  %v468 = vsel %vm185, %v453, 0
  %v470 = vsel %vm185, %v455, 0
  %472 = vmatprep.subr.mxu0 0.0
  %473 = vmatpush1.xpose.msra.mxu0 %v464
  %474 = vmatprep.subr.mxu0 0.0
  %475 = vmatpush1.xpose.msra.mxu0 %v466
  %476 = vmatprep.subr.mxu0 0.0
  %477 = vmatpush1.xpose.msra.mxu0 %v468
  %478 = vmatprep.subr.mxu0 0.0
  %479 = vmatpush1.xpose.msra.mxu0 %v470
  %480 = vmatprep.subr.mxu0 0.0
  %481 = vmatpush1.xpose.msra.mxu0 0.0
  %482 = vmatprep.subr.mxu0 0.0
  %483 = vmatpush1.xpose.msra.mxu0 0.0
  %484 = vmatprep.subr.mxu0 0.0
  %485 = vmatpush1.xpose.msra.mxu0 0.0
  %486 = vmatprep.subr.mxu0 0.0
  %487 = vmatpush1.xpose.msra.mxu0 0.0
  %488 = vmatprep.subr.mxu0 0.0
  %489 = vmatpush1.xpose.msra.mxu0 0.0
  %490 = vmatprep.subr.mxu0 0.0
  %491 = vmatpush1.xpose.msra.mxu0 0.0
  %492 = vmatprep.subr.mxu0 0.0
  %493 = vmatpush1.xpose.msra.mxu0 0.0
  %494 = vmatprep.subr.mxu0 0.0
  %495 = vmatpush1.xpose.msra.mxu0 0.0
  %496 = vmatprep.subr.mxu0 0.0
  %497 = vmatpush1.xpose.msra.mxu0 0.0
  %498 = vmatprep.subr.mxu0 0.0
  %499 = vmatpush1.xpose.msra.mxu0 0.0
  %500 = vmatprep.subr.mxu0 0.0
  %501 = vmatpush1.xpose.msra.mxu0 0.0
  %502 = vmatprep.subr.mxu0 0.0
  %503 = vmatpush1.xpose.msra.mxu0 0.0
  %504 = vmatprep.subr.mxu0 0.0
  %505 = vmatpush1.xpose.msra.mxu0 0.0
  %506 = vmatprep.subr.mxu0 0.0
  %507 = vmatpush1.xpose.msra.mxu0 0.0
  %508 = vmatprep.subr.mxu0 0.0
  %509 = vmatpush1.xpose.msra.mxu0 0.0
  %510 = vmatprep.subr.mxu0 0.0
  %511 = vmatpush1.xpose.msra.mxu0 0.0
  %512 = vmatprep.subr.mxu0 0.0
  %513 = vmatpush1.xpose.msra.mxu0 0.0
  %514 = vmatprep.subr.mxu0 0.0
  %515 = vmatpush1.xpose.msra.mxu0 0.0
  %516 = vmatprep.subr.mxu0 0.0
  %517 = vmatpush1.xpose.msra.mxu0 0.0
  %518 = vmatprep.subr.mxu0 0.0
  %519 = vmatpush1.xpose.msra.mxu0 0.0
  %520 = vmatprep.subr.mxu0 0.0
  %521 = vmatpush1.xpose.msra.mxu0 0.0
  %522 = vmatprep.subr.mxu0 0.0
  %523 = vmatpush1.xpose.msra.mxu0 0.0
  %524 = vmatprep.subr.mxu0 0.0
  %525 = vmatpush1.xpose.msra.mxu0 0.0
  %526 = vmatprep.subr.mxu0 0.0
  %527 = vmatpush1.xpose.msra.mxu0 0.0
  %528 = vmatprep.subr.mxu0 0.0
  %529 = vmatpush1.xpose.msra.mxu0 0.0
  %530 = vmatprep.subr.mxu0 0.0
  %531 = vmatpush1.xpose.msra.mxu0 0.0
  %532 = vmatprep.subr.mxu0 0.0
  %533 = vmatpush1.xpose.msra.mxu0 0.0
  %534 = vmatprep.subr.mxu0 0.0
  %535 = vmatpush1.xpose.msra.mxu0 0.0
  %536 = vmatprep.mubr.f32.mxu0 0.0
  %537 = vmatmul.mubr.f32.gmra.mrb[0].mxu0 %v456
  %v538 = vpop.f32.mrb[0].mxu0
  %v539 = vadd.f32 %v56, %v538
  %v540 = vpop.f32.mrb[0].mxu0
  %541 = vmatprep.mubr.f32.mxu0 0.0
  %542 = vmatmul.mubr.f32.gmra.mrb[0].mxu0 %v458
  %v543 = vpop.f32.mrb[0].mxu0
  %v544 = vadd.f32 %v57, %v543
  %v545 = vpop.f32.mrb[0].mxu0
  %546 = vmatprep.mubr.f32.mxu0 0.0
  %547 = vmatmul.mubr.f32.gmra.mrb[0].mxu0 %v460
  %v548 = vpop.f32.mrb[0].mxu0
  %v549 = vadd.f32 %v58, %v548
  %v550 = vpop.f32.mrb[0].mxu0
  %551 = vmatprep.mubr.f32.mxu0 0.0
  %552 = vmatmul.mubr.f32.gmra.mrb[0].mxu0 %v462
  %v553 = vpop.f32.mrb[0].mxu0
  %v554 = vadd.f32 %v59, %v553
  %v555 = vpop.f32.mrb[0].mxu0
  %556 = vdwg.mxu0
  %v557 = vsel %vm75, %v539, -inf
  %558 = vmax.xlane.f32.xlu0 %v557
  %v559 = vpop.xlane.xlu0 %558
  %v560 = vsel %vm75, %v544, -inf
  %561 = vmax.xlane.f32.xlu0 %v560
  %v562 = vpop.xlane.xlu0 %561
  %v563 = vsel %vm75, %v549, -inf
  %564 = vmax.xlane.f32.xlu0 %v563
  %v565 = vpop.xlane.xlu0 %564
  %v566 = vsel %vm75, %v554, -inf
  %567 = vmax.xlane.f32.xlu0 %v566
  %v568 = vpop.xlane.xlu0 %567
  %v569 = vsub.f32 %v539, %v559
  %v570 = vsub.f32 %v544, %v562
  %v571 = vsub.f32 %v549, %v565
  %v572 = vsub.f32 %v554, %v568
  %v573 = vmul.f32 %v569, 1.442695
  %v574 = vpow.pop %v573
  %v575 = vmul.f32 %v570, 1.442695
  %v576 = vpow.pop %v575
  %v577 = vmul.f32 %v571, 1.442695
  %v578 = vpow.pop %v577
  %v579 = vmul.f32 %v572, 1.442695
  %v580 = vpow.pop %v579
  %v581 = vsel %vm75, %v574, 0.0
  %582 = vadd.xlane.f32.xlu0 %v581
  %v583 = vpop.xlane.xlu0 %582
  %v584 = vsel %vm75, %v576, 0.0
  %585 = vadd.xlane.f32.xlu0 %v584
  %v586 = vpop.xlane.xlu0 %585
  %v587 = vsel %vm75, %v578, 0.0
  %588 = vadd.xlane.f32.xlu0 %v587
  %v589 = vpop.xlane.xlu0 %588
  %v590 = vsel %vm75, %v580, 0.0
  %591 = vadd.xlane.f32.xlu0 %v590
  %v592 = vpop.xlane.xlu0 %591
  %v593 = vrcp.pop %v583
  %v594 = vmul.f32 %v574, %v593
  %v595 = vrcp.pop %v586
  %v596 = vmul.f32 %v576, %v595
  %v597 = vrcp.pop %v589
  %v598 = vmul.f32 %v578, %v597
  %v599 = vrcp.pop %v592
  %v600 = vmul.f32 %v580, %v599
  %601 = vrot.lane.b32.xlu0 %v155, 48
  %v602 = vpop.permute.xlu0 %601
  %603 = vrot.lane.b32.xlu0 %v160, 48
  %v604 = vpop.permute.xlu0 %603
  %605 = vrot.lane.b32.xlu0 %v165, 48
  %v606 = vpop.permute.xlu0 %605
  %607 = vrot.lane.b32.xlu0 %v170, 48
  %v608 = vpop.permute.xlu0 %607
  %v614 = vsel %vm75, %v594, 0
  %v617 = vsel %vm75, %v596, 0
  %v620 = vsel %vm75, %v598, 0
  %v623 = vsel %vm75, %v600, 0
  %625 = vmatprep.subr.mxu0 0.0
  %626 = vmatpush1.msra.mxu0 %v602
  %627 = vmatprep.subr.mxu0 0.0
  %628 = vmatpush1.msra.mxu0 %v604
  %629 = vmatprep.subr.mxu0 0.0
  %630 = vmatpush1.msra.mxu0 %v606
  %631 = vmatprep.subr.mxu0 0.0
  %632 = vmatpush1.msra.mxu0 %v608
  %633 = vmatprep.subr.mxu0 0.0
  %634 = vmatpush1.msra.mxu0 0.0
  %635 = vmatprep.subr.mxu0 0.0
  %636 = vmatpush1.msra.mxu0 0.0
  %637 = vmatprep.subr.mxu0 0.0
  %638 = vmatpush1.msra.mxu0 0.0
  %639 = vmatprep.subr.mxu0 0.0
  %640 = vmatpush1.msra.mxu0 0.0
  %641 = vmatprep.subr.mxu0 0.0
  %642 = vmatpush1.msra.mxu0 0.0
  %643 = vmatprep.subr.mxu0 0.0
  %644 = vmatpush1.msra.mxu0 0.0
  %645 = vmatprep.subr.mxu0 0.0
  %646 = vmatpush1.msra.mxu0 0.0
  %647 = vmatprep.subr.mxu0 0.0
  %648 = vmatpush1.msra.mxu0 0.0
  %649 = vmatprep.subr.mxu0 0.0
  %650 = vmatpush1.msra.mxu0 0.0
  %651 = vmatprep.subr.mxu0 0.0
  %652 = vmatpush1.msra.mxu0 0.0
  %653 = vmatprep.subr.mxu0 0.0
  %654 = vmatpush1.msra.mxu0 0.0
  %655 = vmatprep.subr.mxu0 0.0
  %656 = vmatpush1.msra.mxu0 0.0
  %657 = vmatprep.subr.mxu0 0.0
  %658 = vmatpush1.msra.mxu0 0.0
  %659 = vmatprep.subr.mxu0 0.0
  %660 = vmatpush1.msra.mxu0 0.0
  %661 = vmatprep.subr.mxu0 0.0
  %662 = vmatpush1.msra.mxu0 0.0
  %663 = vmatprep.subr.mxu0 0.0
  %664 = vmatpush1.msra.mxu0 0.0
  %665 = vmatprep.subr.mxu0 0.0
  %666 = vmatpush1.msra.mxu0 0.0
  %667 = vmatprep.subr.mxu0 0.0
  %668 = vmatpush1.msra.mxu0 0.0
  %669 = vmatprep.subr.mxu0 0.0
  %670 = vmatpush1.msra.mxu0 0.0
  %671 = vmatprep.subr.mxu0 0.0
  %672 = vmatpush1.msra.mxu0 0.0
  %673 = vmatprep.subr.mxu0 0.0
  %674 = vmatpush1.msra.mxu0 0.0
  %675 = vmatprep.subr.mxu0 0.0
  %676 = vmatpush1.msra.mxu0 0.0
  %677 = vmatprep.subr.mxu0 0.0
  %678 = vmatpush1.msra.mxu0 0.0
  %679 = vmatprep.subr.mxu0 0.0
  %680 = vmatpush1.msra.mxu0 0.0
  %681 = vmatprep.subr.mxu0 0.0
  %682 = vmatpush1.msra.mxu0 0.0
  %683 = vmatprep.subr.mxu0 0.0
  %684 = vmatpush1.msra.mxu0 0.0
  %685 = vmatprep.subr.mxu0 0.0
  %686 = vmatpush1.msra.mxu0 0.0
  %687 = vmatprep.subr.mxu0 0.0
  %688 = vmatpush1.msra.mxu0 0.0
  %689 = vmatprep.mubr.f32.mxu0 0.0
  %690 = vmatmul.mubr.f32.gmra.mrb[0].mxu0 %v614
  %v691 = vpop.f32.mrb[0].mxu0
  %v692 = vadd.f32 0.0, %v691
  %v693 = vpop.f32.mrb[0].mxu0
  %694 = vmatprep.mubr.f32.mxu0 0.0
  %695 = vmatmul.mubr.f32.gmra.mrb[0].mxu0 %v617
  %v696 = vpop.f32.mrb[0].mxu0
  %v697 = vadd.f32 0.0, %v696
  %v698 = vpop.f32.mrb[0].mxu0
  %699 = vmatprep.mubr.f32.mxu0 0.0
  %700 = vmatmul.mubr.f32.gmra.mrb[0].mxu0 %v620
  %v701 = vpop.f32.mrb[0].mxu0
  %v702 = vadd.f32 0.0, %v701
  %v703 = vpop.f32.mrb[0].mxu0
  %704 = vmatprep.mubr.f32.mxu0 0.0
  %705 = vmatmul.mubr.f32.gmra.mrb[0].mxu0 %v623
  %v706 = vpop.f32.mrb[0].mxu0
  %v707 = vadd.f32 0.0, %v706
  %v708 = vpop.f32.mrb[0].mxu0
  %709 = vdwg.mxu0
  %714 = vrot.lane.b32.xlu0 %v692, 16
  %v715 = vpop.permute.xlu0 %714
  %716 = vrot.lane.b32.xlu0 %v697, 16
  %v717 = vpop.permute.xlu0 %716
  %718 = vrot.lane.b32.xlu0 %v702, 16
  %v719 = vpop.permute.xlu0 %718
  %720 = vrot.lane.b32.xlu0 %v707, 16
  %v721 = vpop.permute.xlu0 %720
  %v726 = vsel %vm185, %v422, %v715
  %v727 = vsel %vm185, %v427, %v717
  %v728 = vsel %vm185, %v432, %v719
  %v729 = vsel %vm185, %v437, %v721
  %v730 = vld [vmem:[%s5] sm:$0xff]
  %v731 = vld [vmem:[%s5 + $0x8] sm:$0xff]
  %v732 = vld [vmem:[%s5 + $0x10] sm:$0xff]
  %v733 = vld [vmem:[%s5 + $0x18] sm:$0xff]
  %v734 = vld [vmem:[%s6] sm:$0x1]
  %v736 = vlaneseq
  %v737 = vshrl.u32 %v736, 7
  %v738 = vsub.s32 0, %v737
  %v739 = vrot.slane %v734, %v738
  %v742 = vsel %vm75, %v726, 0
  %v745 = vsel %vm75, %v727, 0
  %v748 = vsel %vm75, %v728, 0
  %v751 = vsel %vm75, %v729, 0
  %753 = vmatprep.subr.mxu0 0.0
  %754 = vmatpush1.msra.mxu0 %v730
  %755 = vmatprep.subr.mxu0 0.0
  %756 = vmatpush1.msra.mxu0 %v731
  %757 = vmatprep.subr.mxu0 0.0
  %758 = vmatpush1.msra.mxu0 %v732
  %759 = vmatprep.subr.mxu0 0.0
  %760 = vmatpush1.msra.mxu0 %v733
  %761 = vmatprep.subr.mxu0 0.0
  %762 = vmatpush1.msra.mxu0 0.0
  %763 = vmatprep.subr.mxu0 0.0
  %764 = vmatpush1.msra.mxu0 0.0
  %765 = vmatprep.subr.mxu0 0.0
  %766 = vmatpush1.msra.mxu0 0.0
  %767 = vmatprep.subr.mxu0 0.0
  %768 = vmatpush1.msra.mxu0 0.0
  %769 = vmatprep.subr.mxu0 0.0
  %770 = vmatpush1.msra.mxu0 0.0
  %771 = vmatprep.subr.mxu0 0.0
  %772 = vmatpush1.msra.mxu0 0.0
  %773 = vmatprep.subr.mxu0 0.0
  %774 = vmatpush1.msra.mxu0 0.0
  %775 = vmatprep.subr.mxu0 0.0
  %776 = vmatpush1.msra.mxu0 0.0
  %777 = vmatprep.subr.mxu0 0.0
  %778 = vmatpush1.msra.mxu0 0.0
  %779 = vmatprep.subr.mxu0 0.0
  %780 = vmatpush1.msra.mxu0 0.0
  %781 = vmatprep.subr.mxu0 0.0
  %782 = vmatpush1.msra.mxu0 0.0
  %783 = vmatprep.subr.mxu0 0.0
  %784 = vmatpush1.msra.mxu0 0.0
  %785 = vmatprep.subr.mxu0 0.0
  %786 = vmatpush1.msra.mxu0 0.0
  %787 = vmatprep.subr.mxu0 0.0
  %788 = vmatpush1.msra.mxu0 0.0
  %789 = vmatprep.subr.mxu0 0.0
  %790 = vmatpush1.msra.mxu0 0.0
  %791 = vmatprep.subr.mxu0 0.0
  %792 = vmatpush1.msra.mxu0 0.0
  %793 = vmatprep.subr.mxu0 0.0
  %794 = vmatpush1.msra.mxu0 0.0
  %795 = vmatprep.subr.mxu0 0.0
  %796 = vmatpush1.msra.mxu0 0.0
  %797 = vmatprep.subr.mxu0 0.0
  %798 = vmatpush1.msra.mxu0 0.0
  %799 = vmatprep.subr.mxu0 0.0
  %800 = vmatpush1.msra.mxu0 0.0
  %801 = vmatprep.subr.mxu0 0.0
  %802 = vmatpush1.msra.mxu0 0.0
  %803 = vmatprep.subr.mxu0 0.0
  %804 = vmatpush1.msra.mxu0 0.0
  %805 = vmatprep.subr.mxu0 0.0
  %806 = vmatpush1.msra.mxu0 0.0
  %807 = vmatprep.subr.mxu0 0.0
  %808 = vmatpush1.msra.mxu0 0.0
  %809 = vmatprep.subr.mxu0 0.0
  %810 = vmatpush1.msra.mxu0 0.0
  %811 = vmatprep.subr.mxu0 0.0
  %812 = vmatpush1.msra.mxu0 0.0
  %813 = vmatprep.subr.mxu0 0.0
  %814 = vmatpush1.msra.mxu0 0.0
  %815 = vmatprep.subr.mxu0 0.0
  %816 = vmatpush1.msra.mxu0 0.0
  %817 = vmatprep.mubr.f32.mxu0 0.0
  %818 = vmatmul.mubr.f32.gmra.mrb[0].mxu0 %v742
  %v819 = vpop.f32.mrb[0].mxu0
  %v820 = vadd.f32 %v739, %v819
  %v821 = vpop.f32.mrb[0].mxu0
  %822 = vmatprep.mubr.f32.mxu0 0.0
  %823 = vmatmul.mubr.f32.gmra.mrb[0].mxu0 %v745
  %v824 = vpop.f32.mrb[0].mxu0
  %v825 = vadd.f32 %v739, %v824
  %v826 = vpop.f32.mrb[0].mxu0
  %827 = vmatprep.mubr.f32.mxu0 0.0
  %828 = vmatmul.mubr.f32.gmra.mrb[0].mxu0 %v748
  %v829 = vpop.f32.mrb[0].mxu0
  %v830 = vadd.f32 %v739, %v829
  %v831 = vpop.f32.mrb[0].mxu0
  %832 = vmatprep.mubr.f32.mxu0 0.0
  %833 = vmatmul.mubr.f32.gmra.mrb[0].mxu0 %v751
  %v834 = vpop.f32.mrb[0].mxu0
  %v835 = vadd.f32 %v739, %v834
  %v836 = vpop.f32.mrb[0].mxu0
  %837 = vdwg.mxu0
  %v838 = vadd.f32 %v60, %v820
  %v839 = vadd.f32 %v61, %v825
  %v840 = vadd.f32 %v62, %v830
  %v841 = vadd.f32 %v63, %v835
  %v842 = vsel %vm75, %v838, 0.0
  %843 = vadd.xlane.f32.xlu0 %v842
  %v844 = vpop.xlane.xlu0 %843
  %v845 = vsel %vm75, %v839, 0.0
  %846 = vadd.xlane.f32.xlu0 %v845
  %v847 = vpop.xlane.xlu0 %846
  %v848 = vsel %vm75, %v840, 0.0
  %849 = vadd.xlane.f32.xlu0 %v848
  %v850 = vpop.xlane.xlu0 %849
  %v851 = vsel %vm75, %v841, 0.0
  %852 = vadd.xlane.f32.xlu0 %v851
  %v853 = vpop.xlane.xlu0 %852
  %v854 = vmul.f32 %v844, 0.03125
  %v855 = vmul.f32 %v847, 0.03125
  %v856 = vmul.f32 %v850, 0.03125
  %v857 = vmul.f32 %v853, 0.03125
  %v858 = vmul.f32 %v838, %v838
  %v859 = vmul.f32 %v839, %v839
  %v860 = vmul.f32 %v840, %v840
  %v861 = vmul.f32 %v841, %v841
  %v862 = vsel %vm75, %v858, 0.0
  %863 = vadd.xlane.f32.xlu0 %v862
  %v864 = vpop.xlane.xlu0 %863
  %v865 = vsel %vm75, %v859, 0.0
  %866 = vadd.xlane.f32.xlu0 %v865
  %v867 = vpop.xlane.xlu0 %866
  %v868 = vsel %vm75, %v860, 0.0
  %869 = vadd.xlane.f32.xlu0 %v868
  %v870 = vpop.xlane.xlu0 %869
  %v871 = vsel %vm75, %v861, 0.0
  %872 = vadd.xlane.f32.xlu0 %v871
  %v873 = vpop.xlane.xlu0 %872
  %v874 = vmul.f32 %v864, 0.03125
  %v875 = vmul.f32 %v867, 0.03125
  %v876 = vmul.f32 %v870, 0.03125
  %v877 = vmul.f32 %v873, 0.03125
  %v878 = vmul.f32 %v854, %v854
  %v879 = vmul.f32 %v855, %v855
  %v880 = vmul.f32 %v856, %v856
  %v881 = vmul.f32 %v857, %v857
  %v882 = vsub.f32 %v874, %v878
  %v883 = vsub.f32 %v875, %v879
  %v884 = vsub.f32 %v876, %v880
  %v885 = vsub.f32 %v877, %v881
  %v886 = vsub.f32 %v838, %v854
  %v887 = vsub.f32 %v839, %v855
  %v888 = vsub.f32 %v840, %v856
  %v889 = vsub.f32 %v841, %v857
  %v890 = vadd.f32 %v882, 1e-05
  %v891 = vadd.f32 %v883, 1e-05
  %v892 = vadd.f32 %v884, 1e-05
  %v893 = vadd.f32 %v885, 1e-05
  %v894 = vrsqrt.pop %v890
  %v895 = vrsqrt.pop %v891
  %v896 = vrsqrt.pop %v892
  %v897 = vrsqrt.pop %v893
  %v898 = vmul.f32 %v886, %v894
  %v899 = vmul.f32 %v887, %v895
  %v900 = vmul.f32 %v888, %v896
  %v901 = vmul.f32 %v889, %v897
  %v902 = vld [vmem:[%s7] sm:$0x1]
  %v904 = vlaneseq
  %v905 = vshrl.u32 %v904, 7
  %v906 = vsub.s32 0, %v905
  %v907 = vrot.slane %v902, %v906
  %v909 = vmul.f32 %v898, %v907
  %v910 = vmul.f32 %v899, %v907
  %v911 = vmul.f32 %v900, %v907
  %v912 = vmul.f32 %v901, %v907
  %v913 = vld [vmem:[%s8] sm:$0x1]
  %v915 = vlaneseq
  %v916 = vshrl.u32 %v915, 7
  %v917 = vsub.s32 0, %v916
  %v918 = vrot.slane %v913, %v917
  %v920 = vadd.f32 %v909, %v918
  %v921 = vadd.f32 %v910, %v918
  %v922 = vadd.f32 %v911, %v918
  %v923 = vadd.f32 %v912, %v918
  %v924 = vld [vmem:[%s9] sm:$0xff]
  %v925 = vld [vmem:[%s9 + $0x8] sm:$0xff]
  %v926 = vld [vmem:[%s9 + $0x10] sm:$0xff]
  %v927 = vld [vmem:[%s9 + $0x18] sm:$0xff]
  %v928 = vld [vmem:[%s10] sm:$0x1]
  %v930 = vlaneseq
  %v931 = vshrl.u32 %v930, 7
  %v932 = vsub.s32 0, %v931
  %v933 = vrot.slane %v928, %v932
  %v936 = vsel %vm75, %v920, 0
  %v939 = vsel %vm75, %v921, 0
  %v942 = vsel %vm75, %v922, 0
  %v945 = vsel %vm75, %v923, 0
  %947 = vmatprep.subr.mxu0 0.0
  %948 = vmatpush1.msra.mxu0 %v924
  %949 = vmatprep.subr.mxu0 0.0
  %950 = vmatpush1.msra.mxu0 %v925
  %951 = vmatprep.subr.mxu0 0.0
  %952 = vmatpush1.msra.mxu0 %v926
  %953 = vmatprep.subr.mxu0 0.0
  %954 = vmatpush1.msra.mxu0 %v927
  %955 = vmatprep.subr.mxu0 0.0
  %956 = vmatpush1.msra.mxu0 0.0
  %957 = vmatprep.subr.mxu0 0.0
  %958 = vmatpush1.msra.mxu0 0.0
  %959 = vmatprep.subr.mxu0 0.0
  %960 = vmatpush1.msra.mxu0 0.0
  %961 = vmatprep.subr.mxu0 0.0
  %962 = vmatpush1.msra.mxu0 0.0
  %963 = vmatprep.subr.mxu0 0.0
  %964 = vmatpush1.msra.mxu0 0.0
  %965 = vmatprep.subr.mxu0 0.0
  %966 = vmatpush1.msra.mxu0 0.0
  %967 = vmatprep.subr.mxu0 0.0
  %968 = vmatpush1.msra.mxu0 0.0
  %969 = vmatprep.subr.mxu0 0.0
  %970 = vmatpush1.msra.mxu0 0.0
  %971 = vmatprep.subr.mxu0 0.0
  %972 = vmatpush1.msra.mxu0 0.0
  %973 = vmatprep.subr.mxu0 0.0
  %974 = vmatpush1.msra.mxu0 0.0
  %975 = vmatprep.subr.mxu0 0.0
  %976 = vmatpush1.msra.mxu0 0.0
  %977 = vmatprep.subr.mxu0 0.0
  %978 = vmatpush1.msra.mxu0 0.0
  %979 = vmatprep.subr.mxu0 0.0
  %980 = vmatpush1.msra.mxu0 0.0
  %981 = vmatprep.subr.mxu0 0.0
  %982 = vmatpush1.msra.mxu0 0.0
  %983 = vmatprep.subr.mxu0 0.0
  %984 = vmatpush1.msra.mxu0 0.0
  %985 = vmatprep.subr.mxu0 0.0
  %986 = vmatpush1.msra.mxu0 0.0
  %987 = vmatprep.subr.mxu0 0.0
  %988 = vmatpush1.msra.mxu0 0.0
  %989 = vmatprep.subr.mxu0 0.0
  %990 = vmatpush1.msra.mxu0 0.0
  %991 = vmatprep.subr.mxu0 0.0
  %992 = vmatpush1.msra.mxu0 0.0
  %993 = vmatprep.subr.mxu0 0.0
  %994 = vmatpush1.msra.mxu0 0.0
  %995 = vmatprep.subr.mxu0 0.0
  %996 = vmatpush1.msra.mxu0 0.0
  %997 = vmatprep.subr.mxu0 0.0
  %998 = vmatpush1.msra.mxu0 0.0
  %999 = vmatprep.subr.mxu0 0.0
  %1000 = vmatpush1.msra.mxu0 0.0
  %1001 = vmatprep.subr.mxu0 0.0
  %1002 = vmatpush1.msra.mxu0 0.0
  %1003 = vmatprep.subr.mxu0 0.0
  %1004 = vmatpush1.msra.mxu0 0.0
  %1005 = vmatprep.subr.mxu0 0.0
  %1006 = vmatpush1.msra.mxu0 0.0
  %1007 = vmatprep.subr.mxu0 0.0
  %1008 = vmatpush1.msra.mxu0 0.0
  %1009 = vmatprep.subr.mxu0 0.0
  %1010 = vmatpush1.msra.mxu0 0.0
  %1011 = vmatprep.mubr.f32.mxu0 0.0
  %1012 = vmatmul.mubr.f32.gmra.mrb[0].mxu0 %v936
  %v1013 = vpop.f32.mrb[0].mxu0
  %v1014 = vadd.f32 %v933, %v1013
  %v1015 = vpop.f32.mrb[0].mxu0
  %1016 = vmatprep.mubr.f32.mxu0 0.0
  %1017 = vmatmul.mubr.f32.gmra.mrb[0].mxu0 %v939
  %v1018 = vpop.f32.mrb[0].mxu0
  %v1019 = vadd.f32 %v933, %v1018
  %v1020 = vpop.f32.mrb[0].mxu0
  %1021 = vmatprep.mubr.f32.mxu0 0.0
  %1022 = vmatmul.mubr.f32.gmra.mrb[0].mxu0 %v942
  %v1023 = vpop.f32.mrb[0].mxu0
  %v1024 = vadd.f32 %v933, %v1023
  %v1025 = vpop.f32.mrb[0].mxu0
  %1026 = vmatprep.mubr.f32.mxu0 0.0
  %1027 = vmatmul.mubr.f32.gmra.mrb[0].mxu0 %v945
  %v1028 = vpop.f32.mrb[0].mxu0
  %v1029 = vadd.f32 %v933, %v1028
  %v1030 = vpop.f32.mrb[0].mxu0
  %1031 = vdwg.mxu0
  %v1032 = vmax.f32 %v1014, 0.0
  %v1033 = vmax.f32 %v1019, 0.0
  %v1034 = vmax.f32 %v1024, 0.0
  %v1035 = vmax.f32 %v1029, 0.0
  %v1036 = vld [vmem:[%s11] sm:$0xff]
  %v1037 = vld [vmem:[%s11 + $0x8] sm:$0xff]
  %v1038 = vld [vmem:[%s11 + $0x10] sm:$0xff]
  %v1039 = vld [vmem:[%s11 + $0x18] sm:$0xff]
  %v1040 = vld [vmem:[%s11 + $0x20] sm:$0xff]
  %v1041 = vld [vmem:[%s11 + $0x28] sm:$0xff]
  %v1042 = vld [vmem:[%s11 + $0x30] sm:$0xff]
  %v1043 = vld [vmem:[%s11 + $0x38] sm:$0xff]
  %v1044 = vld [vmem:[%s12] sm:$0x1]
  %v1046 = vlaneseq
  %v1047 = vshrl.u32 %v1046, 7
  %v1048 = vsub.s32 0, %v1047
  %v1049 = vrot.slane %v1044, %v1048
  %vm1051 = vcmask 523264
  %v1053 = vsel %vm1051, %v1032, 0
  %v1056 = vsel %vm1051, %v1033, 0
  %v1059 = vsel %vm1051, %v1034, 0
  %v1062 = vsel %vm1051, %v1035, 0
  %1064 = vmatprep.subr.mxu0 0.0
  %1065 = vmatpush1.msra.mxu0 %v1036
  %1066 = vmatprep.subr.mxu0 0.0
  %1067 = vmatpush1.msra.mxu0 %v1037
  %1068 = vmatprep.subr.mxu0 0.0
  %1069 = vmatpush1.msra.mxu0 %v1038
  %1070 = vmatprep.subr.mxu0 0.0
  %1071 = vmatpush1.msra.mxu0 %v1039
  %1072 = vmatprep.subr.mxu0 0.0
  %1073 = vmatpush1.msra.mxu0 %v1040
  %1074 = vmatprep.subr.mxu0 0.0
  %1075 = vmatpush1.msra.mxu0 %v1041
  %1076 = vmatprep.subr.mxu0 0.0
  %1077 = vmatpush1.msra.mxu0 %v1042
  %1078 = vmatprep.subr.mxu0 0.0
  %1079 = vmatpush1.msra.mxu0 %v1043
  %1080 = vmatprep.subr.mxu0 0.0
  %1081 = vmatpush1.msra.mxu0 0.0
  %1082 = vmatprep.subr.mxu0 0.0
  %1083 = vmatpush1.msra.mxu0 0.0
  %1084 = vmatprep.subr.mxu0 0.0
  %1085 = vmatpush1.msra.mxu0 0.0
  %1086 = vmatprep.subr.mxu0 0.0
  %1087 = vmatpush1.msra.mxu0 0.0
  %1088 = vmatprep.subr.mxu0 0.0
  %1089 = vmatpush1.msra.mxu0 0.0
  %1090 = vmatprep.subr.mxu0 0.0
  %1091 = vmatpush1.msra.mxu0 0.0
  %1092 = vmatprep.subr.mxu0 0.0
  %1093 = vmatpush1.msra.mxu0 0.0
  %1094 = vmatprep.subr.mxu0 0.0
  %1095 = vmatpush1.msra.mxu0 0.0
  %1096 = vmatprep.subr.mxu0 0.0
  %1097 = vmatpush1.msra.mxu0 0.0
  %1098 = vmatprep.subr.mxu0 0.0
  %1099 = vmatpush1.msra.mxu0 0.0
  %1100 = vmatprep.subr.mxu0 0.0
  %1101 = vmatpush1.msra.mxu0 0.0
  %1102 = vmatprep.subr.mxu0 0.0
  %1103 = vmatpush1.msra.mxu0 0.0
  %1104 = vmatprep.subr.mxu0 0.0
  %1105 = vmatpush1.msra.mxu0 0.0
  %1106 = vmatprep.subr.mxu0 0.0
  %1107 = vmatpush1.msra.mxu0 0.0
  %1108 = vmatprep.subr.mxu0 0.0
  %1109 = vmatpush1.msra.mxu0 0.0
  %1110 = vmatprep.subr.mxu0 0.0
  %1111 = vmatpush1.msra.mxu0 0.0
  %1112 = vmatprep.subr.mxu0 0.0
  %1113 = vmatpush1.msra.mxu0 0.0
  %1114 = vmatprep.subr.mxu0 0.0
  %1115 = vmatpush1.msra.mxu0 0.0
  %1116 = vmatprep.subr.mxu0 0.0
  %1117 = vmatpush1.msra.mxu0 0.0
  %1118 = vmatprep.subr.mxu0 0.0
  %1119 = vmatpush1.msra.mxu0 0.0
  %1120 = vmatprep.subr.mxu0 0.0
  %1121 = vmatpush1.msra.mxu0 0.0
  %1122 = vmatprep.subr.mxu0 0.0
  %1123 = vmatpush1.msra.mxu0 0.0
  %1124 = vmatprep.subr.mxu0 0.0
  %1125 = vmatpush1.msra.mxu0 0.0
  %1126 = vmatprep.subr.mxu0 0.0
  %1127 = vmatpush1.msra.mxu0 0.0
  %1128 = vmatprep.mubr.f32.mxu0 0.0
  %1129 = vmatmul.mubr.f32.gmra.mrb[0].mxu0 %v1053
  %v1130 = vpop.f32.mrb[0].mxu0
  %v1131 = vadd.f32 %v1049, %v1130
  %v1132 = vpop.f32.mrb[0].mxu0
  %1133 = vmatprep.mubr.f32.mxu0 0.0
  %1134 = vmatmul.mubr.f32.gmra.mrb[0].mxu0 %v1056
  %v1135 = vpop.f32.mrb[0].mxu0
  %v1136 = vadd.f32 %v1049, %v1135
  %v1137 = vpop.f32.mrb[0].mxu0
  %1138 = vmatprep.mubr.f32.mxu0 0.0
  %1139 = vmatmul.mubr.f32.gmra.mrb[0].mxu0 %v1059
  %v1140 = vpop.f32.mrb[0].mxu0
  %v1141 = vadd.f32 %v1049, %v1140
  %v1142 = vpop.f32.mrb[0].mxu0
  %1143 = vmatprep.mubr.f32.mxu0 0.0
  %1144 = vmatmul.mubr.f32.gmra.mrb[0].mxu0 %v1062
  %v1145 = vpop.f32.mrb[0].mxu0
  %v1146 = vadd.f32 %v1049, %v1145
  %v1147 = vpop.f32.mrb[0].mxu0
  %1148 = vdwg.mxu0
  %v1149 = vadd.f32 %v920, %v1131
  %v1150 = vadd.f32 %v921, %v1136
  %v1151 = vadd.f32 %v922, %v1141
  %v1152 = vadd.f32 %v923, %v1146
  %v1153 = vsel %vm75, %v1149, 0.0
  %1154 = vadd.xlane.f32.xlu0 %v1153
  %v1155 = vpop.xlane.xlu0 %1154
  %v1156 = vsel %vm75, %v1150, 0.0
  %1157 = vadd.xlane.f32.xlu0 %v1156
  %v1158 = vpop.xlane.xlu0 %1157
  %v1159 = vsel %vm75, %v1151, 0.0
  %1160 = vadd.xlane.f32.xlu0 %v1159
  %v1161 = vpop.xlane.xlu0 %1160
  %v1162 = vsel %vm75, %v1152, 0.0
  %1163 = vadd.xlane.f32.xlu0 %v1162
  %v1164 = vpop.xlane.xlu0 %1163
  %v1165 = vmul.f32 %v1155, 0.03125
  %v1166 = vmul.f32 %v1158, 0.03125
  %v1167 = vmul.f32 %v1161, 0.03125
  %v1168 = vmul.f32 %v1164, 0.03125
  %v1169 = vmul.f32 %v1149, %v1149
  %v1170 = vmul.f32 %v1150, %v1150
  %v1171 = vmul.f32 %v1151, %v1151
  %v1172 = vmul.f32 %v1152, %v1152
  %v1173 = vsel %vm75, %v1169, 0.0
  %1174 = vadd.xlane.f32.xlu0 %v1173
  %v1175 = vpop.xlane.xlu0 %1174
  %v1176 = vsel %vm75, %v1170, 0.0
  %1177 = vadd.xlane.f32.xlu0 %v1176
  %v1178 = vpop.xlane.xlu0 %1177
  %v1179 = vsel %vm75, %v1171, 0.0
  %1180 = vadd.xlane.f32.xlu0 %v1179
  %v1181 = vpop.xlane.xlu0 %1180
  %v1182 = vsel %vm75, %v1172, 0.0
  %1183 = vadd.xlane.f32.xlu0 %v1182
  %v1184 = vpop.xlane.xlu0 %1183
  %v1185 = vmul.f32 %v1175, 0.03125
  %v1186 = vmul.f32 %v1178, 0.03125
  %v1187 = vmul.f32 %v1181, 0.03125
  %v1188 = vmul.f32 %v1184, 0.03125
  %v1189 = vmul.f32 %v1165, %v1165
  %v1190 = vmul.f32 %v1166, %v1166
  %v1191 = vmul.f32 %v1167, %v1167
  %v1192 = vmul.f32 %v1168, %v1168
  %v1193 = vsub.f32 %v1185, %v1189
  %v1194 = vsub.f32 %v1186, %v1190
  %v1195 = vsub.f32 %v1187, %v1191
  %v1196 = vsub.f32 %v1188, %v1192
  %v1197 = vsub.f32 %v1149, %v1165
  %v1198 = vsub.f32 %v1150, %v1166
  %v1199 = vsub.f32 %v1151, %v1167
  %v1200 = vsub.f32 %v1152, %v1168
  %v1201 = vadd.f32 %v1193, 1e-05
  %v1202 = vadd.f32 %v1194, 1e-05
  %v1203 = vadd.f32 %v1195, 1e-05
  %v1204 = vadd.f32 %v1196, 1e-05
  %v1205 = vrsqrt.pop %v1201
  %v1206 = vrsqrt.pop %v1202
  %v1207 = vrsqrt.pop %v1203
  %v1208 = vrsqrt.pop %v1204
  %v1209 = vmul.f32 %v1197, %v1205
  %v1210 = vmul.f32 %v1198, %v1206
  %v1211 = vmul.f32 %v1199, %v1207
  %v1212 = vmul.f32 %v1200, %v1208
  %v1213 = vld [vmem:[%s13] sm:$0x1]
  %v1215 = vlaneseq
  %v1216 = vshrl.u32 %v1215, 7
  %v1217 = vsub.s32 0, %v1216
  %v1218 = vrot.slane %v1213, %v1217
  %v1220 = vmul.f32 %v1209, %v1218
  %v1221 = vmul.f32 %v1210, %v1218
  %v1222 = vmul.f32 %v1211, %v1218
  %v1223 = vmul.f32 %v1212, %v1218
  %v1224 = vld [vmem:[%s14] sm:$0x1]
  %v1226 = vlaneseq
  %v1227 = vshrl.u32 %v1226, 7
  %v1228 = vsub.s32 0, %v1227
  %v1229 = vrot.slane %v1224, %v1228
  %v1231 = vadd.f32 %v1220, %v1229
  %v1232 = vadd.f32 %v1221, %v1229
  %v1233 = vadd.f32 %v1222, %v1229
  %v1234 = vadd.f32 %v1223, %v1229
  %s1235 = scalar_lea.vmem %s3, 32
  %v1236 = vld [vmem:[%s1235] sm:$0xff]
  %v1237 = vld [vmem:[%s1235 + $0x8] sm:$0xff]
  %v1238 = vld [vmem:[%s1235 + $0x10] sm:$0xff]
  %v1239 = vld [vmem:[%s1235 + $0x18] sm:$0xff]
  %s1240 = scalar_lea.vmem %s4, 1
  %v1241 = vld [vmem:[%s1240] sm:$0x1]
  %v1243 = vlaneseq
  %v1244 = vshrl.u32 %v1243, 7
  %v1245 = vsub.s32 0, %v1244
  %v1246 = vrot.slane %v1241, %v1245
  %v1249 = vsel %vm75, %v1231, 0
  %v1252 = vsel %vm75, %v1232, 0
  %v1255 = vsel %vm75, %v1233, 0
  %v1258 = vsel %vm75, %v1234, 0
  %1260 = vmatprep.subr.mxu0 0.0
  %1261 = vmatpush1.msra.mxu0 %v1236
  %1262 = vmatprep.subr.mxu0 0.0
  %1263 = vmatpush1.msra.mxu0 %v1237
  %1264 = vmatprep.subr.mxu0 0.0
  %1265 = vmatpush1.msra.mxu0 %v1238
  %1266 = vmatprep.subr.mxu0 0.0
  %1267 = vmatpush1.msra.mxu0 %v1239
  %1268 = vmatprep.subr.mxu0 0.0
  %1269 = vmatpush1.msra.mxu0 0.0
  %1270 = vmatprep.subr.mxu0 0.0
  %1271 = vmatpush1.msra.mxu0 0.0
  %1272 = vmatprep.subr.mxu0 0.0
  %1273 = vmatpush1.msra.mxu0 0.0
  %1274 = vmatprep.subr.mxu0 0.0
  %1275 = vmatpush1.msra.mxu0 0.0
  %1276 = vmatprep.subr.mxu0 0.0
  %1277 = vmatpush1.msra.mxu0 0.0
  %1278 = vmatprep.subr.mxu0 0.0
  %1279 = vmatpush1.msra.mxu0 0.0
  %1280 = vmatprep.subr.mxu0 0.0
  %1281 = vmatpush1.msra.mxu0 0.0
  %1282 = vmatprep.subr.mxu0 0.0
  %1283 = vmatpush1.msra.mxu0 0.0
  %1284 = vmatprep.subr.mxu0 0.0
  %1285 = vmatpush1.msra.mxu0 0.0
  %1286 = vmatprep.subr.mxu0 0.0
  %1287 = vmatpush1.msra.mxu0 0.0
  %1288 = vmatprep.subr.mxu0 0.0
  %1289 = vmatpush1.msra.mxu0 0.0
  %1290 = vmatprep.subr.mxu0 0.0
  %1291 = vmatpush1.msra.mxu0 0.0
  %1292 = vmatprep.subr.mxu0 0.0
  %1293 = vmatpush1.msra.mxu0 0.0
  %1294 = vmatprep.subr.mxu0 0.0
  %1295 = vmatpush1.msra.mxu0 0.0
  %1296 = vmatprep.subr.mxu0 0.0
  %1297 = vmatpush1.msra.mxu0 0.0
  %1298 = vmatprep.subr.mxu0 0.0
  %1299 = vmatpush1.msra.mxu0 0.0
  %1300 = vmatprep.subr.mxu0 0.0
  %1301 = vmatpush1.msra.mxu0 0.0
  %1302 = vmatprep.subr.mxu0 0.0
  %1303 = vmatpush1.msra.mxu0 0.0
  %1304 = vmatprep.subr.mxu0 0.0
  %1305 = vmatpush1.msra.mxu0 0.0
  %1306 = vmatprep.subr.mxu0 0.0
  %1307 = vmatpush1.msra.mxu0 0.0
  %1308 = vmatprep.subr.mxu0 0.0
  %1309 = vmatpush1.msra.mxu0 0.0
  %1310 = vmatprep.subr.mxu0 0.0
  %1311 = vmatpush1.msra.mxu0 0.0
  %1312 = vmatprep.subr.mxu0 0.0
  %1313 = vmatpush1.msra.mxu0 0.0
  %1314 = vmatprep.subr.mxu0 0.0
  %1315 = vmatpush1.msra.mxu0 0.0
  %1316 = vmatprep.subr.mxu0 0.0
  %1317 = vmatpush1.msra.mxu0 0.0
  %1318 = vmatprep.subr.mxu0 0.0
  %1319 = vmatpush1.msra.mxu0 0.0
  %1320 = vmatprep.subr.mxu0 0.0
  %1321 = vmatpush1.msra.mxu0 0.0
  %1322 = vmatprep.subr.mxu0 0.0
  %1323 = vmatpush1.msra.mxu0 0.0
  %1324 = vmatprep.mubr.f32.mxu0 0.0
  %1325 = vmatmul.mubr.f32.gmra.mrb[0].mxu0 %v1249
  %v1326 = vpop.f32.mrb[0].mxu0
  %v1327 = vadd.f32 %v1246, %v1326
  %v1328 = vpop.f32.mrb[0].mxu0
  %1329 = vmatprep.mubr.f32.mxu0 0.0
  %1330 = vmatmul.mubr.f32.gmra.mrb[0].mxu0 %v1252
  %v1331 = vpop.f32.mrb[0].mxu0
  %v1332 = vadd.f32 %v1246, %v1331
  %v1333 = vpop.f32.mrb[0].mxu0
  %1334 = vmatprep.mubr.f32.mxu0 0.0
  %1335 = vmatmul.mubr.f32.gmra.mrb[0].mxu0 %v1255
  %v1336 = vpop.f32.mrb[0].mxu0
  %v1337 = vadd.f32 %v1246, %v1336
  %v1338 = vpop.f32.mrb[0].mxu0
  %1339 = vmatprep.mubr.f32.mxu0 0.0
  %1340 = vmatmul.mubr.f32.gmra.mrb[0].mxu0 %v1258
  %v1341 = vpop.f32.mrb[0].mxu0
  %v1342 = vadd.f32 %v1246, %v1341
  %v1343 = vpop.f32.mrb[0].mxu0
  %1344 = vdwg.mxu0
  %1349 = vrot.lane.b32.xlu0 %v1327, 96
  %v1350 = vpop.permute.xlu0 %1349
  %1351 = vrot.lane.b32.xlu0 %v1332, 96
  %v1352 = vpop.permute.xlu0 %1351
  %1353 = vrot.lane.b32.xlu0 %v1337, 96
  %v1354 = vpop.permute.xlu0 %1353
  %1355 = vrot.lane.b32.xlu0 %v1342, 96
  %v1356 = vpop.permute.xlu0 %1355
  %v1357 = vsel %vm185, %v1327, 0
  %v1359 = vsel %vm185, %v1332, 0
  %v1361 = vsel %vm185, %v1337, 0
  %v1363 = vsel %vm185, %v1342, 0
  %v1365 = vsel %vm185, %v1350, 0
  %v1367 = vsel %vm185, %v1352, 0
  %v1369 = vsel %vm185, %v1354, 0
  %v1371 = vsel %vm185, %v1356, 0
  %1373 = vmatprep.subr.mxu0 0.0
  %1374 = vmatpush1.xpose.msra.mxu0 %v1365
  %1375 = vmatprep.subr.mxu0 0.0
  %1376 = vmatpush1.xpose.msra.mxu0 %v1367
  %1377 = vmatprep.subr.mxu0 0.0
  %1378 = vmatpush1.xpose.msra.mxu0 %v1369
  %1379 = vmatprep.subr.mxu0 0.0
  %1380 = vmatpush1.xpose.msra.mxu0 %v1371
  %1381 = vmatprep.subr.mxu0 0.0
  %1382 = vmatpush1.xpose.msra.mxu0 0.0
  %1383 = vmatprep.subr.mxu0 0.0
  %1384 = vmatpush1.xpose.msra.mxu0 0.0
  %1385 = vmatprep.subr.mxu0 0.0
  %1386 = vmatpush1.xpose.msra.mxu0 0.0
  %1387 = vmatprep.subr.mxu0 0.0
  %1388 = vmatpush1.xpose.msra.mxu0 0.0
  %1389 = vmatprep.subr.mxu0 0.0
  %1390 = vmatpush1.xpose.msra.mxu0 0.0
  %1391 = vmatprep.subr.mxu0 0.0
  %1392 = vmatpush1.xpose.msra.mxu0 0.0
  %1393 = vmatprep.subr.mxu0 0.0
  %1394 = vmatpush1.xpose.msra.mxu0 0.0
  %1395 = vmatprep.subr.mxu0 0.0
  %1396 = vmatpush1.xpose.msra.mxu0 0.0
  %1397 = vmatprep.subr.mxu0 0.0
  %1398 = vmatpush1.xpose.msra.mxu0 0.0
  %1399 = vmatprep.subr.mxu0 0.0
  %1400 = vmatpush1.xpose.msra.mxu0 0.0
  %1401 = vmatprep.subr.mxu0 0.0
  %1402 = vmatpush1.xpose.msra.mxu0 0.0
  %1403 = vmatprep.subr.mxu0 0.0
  %1404 = vmatpush1.xpose.msra.mxu0 0.0
  %1405 = vmatprep.subr.mxu0 0.0
  %1406 = vmatpush1.xpose.msra.mxu0 0.0
  %1407 = vmatprep.subr.mxu0 0.0
  %1408 = vmatpush1.xpose.msra.mxu0 0.0
  %1409 = vmatprep.subr.mxu0 0.0
  %1410 = vmatpush1.xpose.msra.mxu0 0.0
  %1411 = vmatprep.subr.mxu0 0.0
  %1412 = vmatpush1.xpose.msra.mxu0 0.0
  %1413 = vmatprep.subr.mxu0 0.0
  %1414 = vmatpush1.xpose.msra.mxu0 0.0
  %1415 = vmatprep.subr.mxu0 0.0
  %1416 = vmatpush1.xpose.msra.mxu0 0.0
  %1417 = vmatprep.subr.mxu0 0.0
  %1418 = vmatpush1.xpose.msra.mxu0 0.0
  %1419 = vmatprep.subr.mxu0 0.0
  %1420 = vmatpush1.xpose.msra.mxu0 0.0
  %1421 = vmatprep.subr.mxu0 0.0
  %1422 = vmatpush1.xpose.msra.mxu0 0.0
  %1423 = vmatprep.subr.mxu0 0.0
  %1424 = vmatpush1.xpose.msra.mxu0 0.0
  %1425 = vmatprep.subr.mxu0 0.0
  %1426 = vmatpush1.xpose.msra.mxu0 0.0
  %1427 = vmatprep.subr.mxu0 0.0
  %1428 = vmatpush1.xpose.msra.mxu0 0.0
  %1429 = vmatprep.subr.mxu0 0.0
  %1430 = vmatpush1.xpose.msra.mxu0 0.0
  %1431 = vmatprep.subr.mxu0 0.0
  %1432 = vmatpush1.xpose.msra.mxu0 0.0
  %1433 = vmatprep.subr.mxu0 0.0
  %1434 = vmatpush1.xpose.msra.mxu0 0.0
  %1435 = vmatprep.subr.mxu0 0.0
  %1436 = vmatpush1.xpose.msra.mxu0 0.0
  %1437 = vmatprep.mubr.f32.mxu0 0.0
  %1438 = vmatmul.mubr.f32.gmra.mrb[0].mxu0 %v1357
  %v1439 = vpop.f32.mrb[0].mxu0
  %v1440 = vadd.f32 %v56, %v1439
  %v1441 = vpop.f32.mrb[0].mxu0
  %1442 = vmatprep.mubr.f32.mxu0 0.0
  %1443 = vmatmul.mubr.f32.gmra.mrb[0].mxu0 %v1359
  %v1444 = vpop.f32.mrb[0].mxu0
  %v1445 = vadd.f32 %v57, %v1444
  %v1446 = vpop.f32.mrb[0].mxu0
  %1447 = vmatprep.mubr.f32.mxu0 0.0
  %1448 = vmatmul.mubr.f32.gmra.mrb[0].mxu0 %v1361
  %v1449 = vpop.f32.mrb[0].mxu0
  %v1450 = vadd.f32 %v58, %v1449
  %v1451 = vpop.f32.mrb[0].mxu0
  %1452 = vmatprep.mubr.f32.mxu0 0.0
  %1453 = vmatmul.mubr.f32.gmra.mrb[0].mxu0 %v1363
  %v1454 = vpop.f32.mrb[0].mxu0
  %v1455 = vadd.f32 %v59, %v1454
  %v1456 = vpop.f32.mrb[0].mxu0
  %1457 = vdwg.mxu0
  %v1458 = vsel %vm75, %v1440, -inf
  %1459 = vmax.xlane.f32.xlu0 %v1458
  %v1460 = vpop.xlane.xlu0 %1459
  %v1461 = vsel %vm75, %v1445, -inf
  %1462 = vmax.xlane.f32.xlu0 %v1461
  %v1463 = vpop.xlane.xlu0 %1462
  %v1464 = vsel %vm75, %v1450, -inf
  %1465 = vmax.xlane.f32.xlu0 %v1464
  %v1466 = vpop.xlane.xlu0 %1465
  %v1467 = vsel %vm75, %v1455, -inf
  %1468 = vmax.xlane.f32.xlu0 %v1467
  %v1469 = vpop.xlane.xlu0 %1468
  %v1470 = vsub.f32 %v1440, %v1460
  %v1471 = vsub.f32 %v1445, %v1463
  %v1472 = vsub.f32 %v1450, %v1466
  %v1473 = vsub.f32 %v1455, %v1469
  %v1474 = vmul.f32 %v1470, 1.442695
  %v1475 = vpow.pop %v1474
  %v1476 = vmul.f32 %v1471, 1.442695
  %v1477 = vpow.pop %v1476
  %v1478 = vmul.f32 %v1472, 1.442695
  %v1479 = vpow.pop %v1478
  %v1480 = vmul.f32 %v1473, 1.442695
  %v1481 = vpow.pop %v1480
  %v1482 = vsel %vm75, %v1475, 0.0
  %1483 = vadd.xlane.f32.xlu0 %v1482
  %v1484 = vpop.xlane.xlu0 %1483
  %v1485 = vsel %vm75, %v1477, 0.0
  %1486 = vadd.xlane.f32.xlu0 %v1485
  %v1487 = vpop.xlane.xlu0 %1486
  %v1488 = vsel %vm75, %v1479, 0.0
  %1489 = vadd.xlane.f32.xlu0 %v1488
  %v1490 = vpop.xlane.xlu0 %1489
  %v1491 = vsel %vm75, %v1481, 0.0
  %1492 = vadd.xlane.f32.xlu0 %v1491
  %v1493 = vpop.xlane.xlu0 %1492
  %v1494 = vrcp.pop %v1484
  %v1495 = vmul.f32 %v1475, %v1494
  %v1496 = vrcp.pop %v1487
  %v1497 = vmul.f32 %v1477, %v1496
  %v1498 = vrcp.pop %v1490
  %v1499 = vmul.f32 %v1479, %v1498
  %v1500 = vrcp.pop %v1493
  %v1501 = vmul.f32 %v1481, %v1500
  %1502 = vrot.lane.b32.xlu0 %v1327, 64
  %v1503 = vpop.permute.xlu0 %1502
  %1504 = vrot.lane.b32.xlu0 %v1332, 64
  %v1505 = vpop.permute.xlu0 %1504
  %1506 = vrot.lane.b32.xlu0 %v1337, 64
  %v1507 = vpop.permute.xlu0 %1506
  %1508 = vrot.lane.b32.xlu0 %v1342, 64
  %v1509 = vpop.permute.xlu0 %1508
  %v1515 = vsel %vm75, %v1495, 0
  %v1518 = vsel %vm75, %v1497, 0
  %v1521 = vsel %vm75, %v1499, 0
  %v1524 = vsel %vm75, %v1501, 0
  %1526 = vmatprep.subr.mxu0 0.0
  %1527 = vmatpush1.msra.mxu0 %v1503
  %1528 = vmatprep.subr.mxu0 0.0
  %1529 = vmatpush1.msra.mxu0 %v1505
  %1530 = vmatprep.subr.mxu0 0.0
  %1531 = vmatpush1.msra.mxu0 %v1507
  %1532 = vmatprep.subr.mxu0 0.0
  %1533 = vmatpush1.msra.mxu0 %v1509
  %1534 = vmatprep.subr.mxu0 0.0
  %1535 = vmatpush1.msra.mxu0 0.0
  %1536 = vmatprep.subr.mxu0 0.0
  %1537 = vmatpush1.msra.mxu0 0.0
  %1538 = vmatprep.subr.mxu0 0.0
  %1539 = vmatpush1.msra.mxu0 0.0
  %1540 = vmatprep.subr.mxu0 0.0
  %1541 = vmatpush1.msra.mxu0 0.0
  %1542 = vmatprep.subr.mxu0 0.0
  %1543 = vmatpush1.msra.mxu0 0.0
  %1544 = vmatprep.subr.mxu0 0.0
  %1545 = vmatpush1.msra.mxu0 0.0
  %1546 = vmatprep.subr.mxu0 0.0
  %1547 = vmatpush1.msra.mxu0 0.0
  %1548 = vmatprep.subr.mxu0 0.0
  %1549 = vmatpush1.msra.mxu0 0.0
  %1550 = vmatprep.subr.mxu0 0.0
  %1551 = vmatpush1.msra.mxu0 0.0
  %1552 = vmatprep.subr.mxu0 0.0
  %1553 = vmatpush1.msra.mxu0 0.0
  %1554 = vmatprep.subr.mxu0 0.0
  %1555 = vmatpush1.msra.mxu0 0.0
  %1556 = vmatprep.subr.mxu0 0.0
  %1557 = vmatpush1.msra.mxu0 0.0
  %1558 = vmatprep.subr.mxu0 0.0
  %1559 = vmatpush1.msra.mxu0 0.0
  %1560 = vmatprep.subr.mxu0 0.0
  %1561 = vmatpush1.msra.mxu0 0.0
  %1562 = vmatprep.subr.mxu0 0.0
  %1563 = vmatpush1.msra.mxu0 0.0
  %1564 = vmatprep.subr.mxu0 0.0
  %1565 = vmatpush1.msra.mxu0 0.0
  %1566 = vmatprep.subr.mxu0 0.0
  %1567 = vmatpush1.msra.mxu0 0.0
  %1568 = vmatprep.subr.mxu0 0.0
  %1569 = vmatpush1.msra.mxu0 0.0
  %1570 = vmatprep.subr.mxu0 0.0
  %1571 = vmatpush1.msra.mxu0 0.0
  %1572 = vmatprep.subr.mxu0 0.0
  %1573 = vmatpush1.msra.mxu0 0.0
  %1574 = vmatprep.subr.mxu0 0.0
  %1575 = vmatpush1.msra.mxu0 0.0
  %1576 = vmatprep.subr.mxu0 0.0
  %1577 = vmatpush1.msra.mxu0 0.0
  %1578 = vmatprep.subr.mxu0 0.0
  %1579 = vmatpush1.msra.mxu0 0.0
  %1580 = vmatprep.subr.mxu0 0.0
  %1581 = vmatpush1.msra.mxu0 0.0
  %1582 = vmatprep.subr.mxu0 0.0
  %1583 = vmatpush1.msra.mxu0 0.0
  %1584 = vmatprep.subr.mxu0 0.0
  %1585 = vmatpush1.msra.mxu0 0.0
  %1586 = vmatprep.subr.mxu0 0.0
  %1587 = vmatpush1.msra.mxu0 0.0
  %1588 = vmatprep.subr.mxu0 0.0
  %1589 = vmatpush1.msra.mxu0 0.0
  %1590 = vmatprep.mubr.f32.mxu0 0.0
  %1591 = vmatmul.mubr.f32.gmra.mrb[0].mxu0 %v1515
  %v1592 = vpop.f32.mrb[0].mxu0
  %v1593 = vadd.f32 0.0, %v1592
  %v1594 = vpop.f32.mrb[0].mxu0
  %1595 = vmatprep.mubr.f32.mxu0 0.0
  %1596 = vmatmul.mubr.f32.gmra.mrb[0].mxu0 %v1518
  %v1597 = vpop.f32.mrb[0].mxu0
  %v1598 = vadd.f32 0.0, %v1597
  %v1599 = vpop.f32.mrb[0].mxu0
  %1600 = vmatprep.mubr.f32.mxu0 0.0
  %1601 = vmatmul.mubr.f32.gmra.mrb[0].mxu0 %v1521
  %v1602 = vpop.f32.mrb[0].mxu0
  %v1603 = vadd.f32 0.0, %v1602
  %v1604 = vpop.f32.mrb[0].mxu0
  %1605 = vmatprep.mubr.f32.mxu0 0.0
  %1606 = vmatmul.mubr.f32.gmra.mrb[0].mxu0 %v1524
  %v1607 = vpop.f32.mrb[0].mxu0
  %v1608 = vadd.f32 0.0, %v1607
  %v1609 = vpop.f32.mrb[0].mxu0
  %1610 = vdwg.mxu0
  %1611 = vrot.lane.b32.xlu0 %v1327, 112
  %v1612 = vpop.permute.xlu0 %1611
  %1613 = vrot.lane.b32.xlu0 %v1332, 112
  %v1614 = vpop.permute.xlu0 %1613
  %1615 = vrot.lane.b32.xlu0 %v1337, 112
  %v1616 = vpop.permute.xlu0 %1615
  %1617 = vrot.lane.b32.xlu0 %v1342, 112
  %v1618 = vpop.permute.xlu0 %1617
  %1619 = vrot.lane.b32.xlu0 %v1327, 80
  %v1620 = vpop.permute.xlu0 %1619
  %1621 = vrot.lane.b32.xlu0 %v1332, 80
  %v1622 = vpop.permute.xlu0 %1621
  %1623 = vrot.lane.b32.xlu0 %v1337, 80
  %v1624 = vpop.permute.xlu0 %1623
  %1625 = vrot.lane.b32.xlu0 %v1342, 80
  %v1626 = vpop.permute.xlu0 %1625
  %v1627 = vsel %vm185, %v1612, 0
  %v1629 = vsel %vm185, %v1614, 0
  %v1631 = vsel %vm185, %v1616, 0
  %v1633 = vsel %vm185, %v1618, 0
  %v1635 = vsel %vm185, %v1620, 0
  %v1637 = vsel %vm185, %v1622, 0
  %v1639 = vsel %vm185, %v1624, 0
  %v1641 = vsel %vm185, %v1626, 0
  %1643 = vmatprep.subr.mxu0 0.0
  %1644 = vmatpush1.xpose.msra.mxu0 %v1635
  %1645 = vmatprep.subr.mxu0 0.0
  %1646 = vmatpush1.xpose.msra.mxu0 %v1637
  %1647 = vmatprep.subr.mxu0 0.0
  %1648 = vmatpush1.xpose.msra.mxu0 %v1639
  %1649 = vmatprep.subr.mxu0 0.0
  %1650 = vmatpush1.xpose.msra.mxu0 %v1641
  %1651 = vmatprep.subr.mxu0 0.0
  %1652 = vmatpush1.xpose.msra.mxu0 0.0
  %1653 = vmatprep.subr.mxu0 0.0
  %1654 = vmatpush1.xpose.msra.mxu0 0.0
  %1655 = vmatprep.subr.mxu0 0.0
  %1656 = vmatpush1.xpose.msra.mxu0 0.0
  %1657 = vmatprep.subr.mxu0 0.0
  %1658 = vmatpush1.xpose.msra.mxu0 0.0
  %1659 = vmatprep.subr.mxu0 0.0
  %1660 = vmatpush1.xpose.msra.mxu0 0.0
  %1661 = vmatprep.subr.mxu0 0.0
  %1662 = vmatpush1.xpose.msra.mxu0 0.0
  %1663 = vmatprep.subr.mxu0 0.0
  %1664 = vmatpush1.xpose.msra.mxu0 0.0
  %1665 = vmatprep.subr.mxu0 0.0
  %1666 = vmatpush1.xpose.msra.mxu0 0.0
  %1667 = vmatprep.subr.mxu0 0.0
  %1668 = vmatpush1.xpose.msra.mxu0 0.0
  %1669 = vmatprep.subr.mxu0 0.0
  %1670 = vmatpush1.xpose.msra.mxu0 0.0
  %1671 = vmatprep.subr.mxu0 0.0
  %1672 = vmatpush1.xpose.msra.mxu0 0.0
  %1673 = vmatprep.subr.mxu0 0.0
  %1674 = vmatpush1.xpose.msra.mxu0 0.0
  %1675 = vmatprep.subr.mxu0 0.0
  %1676 = vmatpush1.xpose.msra.mxu0 0.0
  %1677 = vmatprep.subr.mxu0 0.0
  %1678 = vmatpush1.xpose.msra.mxu0 0.0
  %1679 = vmatprep.subr.mxu0 0.0
  %1680 = vmatpush1.xpose.msra.mxu0 0.0
  %1681 = vmatprep.subr.mxu0 0.0
  %1682 = vmatpush1.xpose.msra.mxu0 0.0
  %1683 = vmatprep.subr.mxu0 0.0
  %1684 = vmatpush1.xpose.msra.mxu0 0.0
  %1685 = vmatprep.subr.mxu0 0.0
  %1686 = vmatpush1.xpose.msra.mxu0 0.0
  %1687 = vmatprep.subr.mxu0 0.0
  %1688 = vmatpush1.xpose.msra.mxu0 0.0
  %1689 = vmatprep.subr.mxu0 0.0
  %1690 = vmatpush1.xpose.msra.mxu0 0.0
  %1691 = vmatprep.subr.mxu0 0.0
  %1692 = vmatpush1.xpose.msra.mxu0 0.0
  %1693 = vmatprep.subr.mxu0 0.0
  %1694 = vmatpush1.xpose.msra.mxu0 0.0
  %1695 = vmatprep.subr.mxu0 0.0
  %1696 = vmatpush1.xpose.msra.mxu0 0.0
  %1697 = vmatprep.subr.mxu0 0.0
  %1698 = vmatpush1.xpose.msra.mxu0 0.0
  %1699 = vmatprep.subr.mxu0 0.0
  %1700 = vmatpush1.xpose.msra.mxu0 0.0
  %1701 = vmatprep.subr.mxu0 0.0
  %1702 = vmatpush1.xpose.msra.mxu0 0.0
  %1703 = vmatprep.subr.mxu0 0.0
  %1704 = vmatpush1.xpose.msra.mxu0 0.0
  %1705 = vmatprep.subr.mxu0 0.0
  %1706 = vmatpush1.xpose.msra.mxu0 0.0
  %1707 = vmatprep.mubr.f32.mxu0 0.0
  %1708 = vmatmul.mubr.f32.gmra.mrb[0].mxu0 %v1627
  %v1709 = vpop.f32.mrb[0].mxu0
  %v1710 = vadd.f32 %v56, %v1709
  %v1711 = vpop.f32.mrb[0].mxu0
  %1712 = vmatprep.mubr.f32.mxu0 0.0
  %1713 = vmatmul.mubr.f32.gmra.mrb[0].mxu0 %v1629
  %v1714 = vpop.f32.mrb[0].mxu0
  %v1715 = vadd.f32 %v57, %v1714
  %v1716 = vpop.f32.mrb[0].mxu0
  %1717 = vmatprep.mubr.f32.mxu0 0.0
  %1718 = vmatmul.mubr.f32.gmra.mrb[0].mxu0 %v1631
  %v1719 = vpop.f32.mrb[0].mxu0
  %v1720 = vadd.f32 %v58, %v1719
  %v1721 = vpop.f32.mrb[0].mxu0
  %1722 = vmatprep.mubr.f32.mxu0 0.0
  %1723 = vmatmul.mubr.f32.gmra.mrb[0].mxu0 %v1633
  %v1724 = vpop.f32.mrb[0].mxu0
  %v1725 = vadd.f32 %v59, %v1724
  %v1726 = vpop.f32.mrb[0].mxu0
  %1727 = vdwg.mxu0
  %v1728 = vsel %vm75, %v1710, -inf
  %1729 = vmax.xlane.f32.xlu0 %v1728
  %v1730 = vpop.xlane.xlu0 %1729
  %v1731 = vsel %vm75, %v1715, -inf
  %1732 = vmax.xlane.f32.xlu0 %v1731
  %v1733 = vpop.xlane.xlu0 %1732
  %v1734 = vsel %vm75, %v1720, -inf
  %1735 = vmax.xlane.f32.xlu0 %v1734
  %v1736 = vpop.xlane.xlu0 %1735
  %v1737 = vsel %vm75, %v1725, -inf
  %1738 = vmax.xlane.f32.xlu0 %v1737
  %v1739 = vpop.xlane.xlu0 %1738
  %v1740 = vsub.f32 %v1710, %v1730
  %v1741 = vsub.f32 %v1715, %v1733
  %v1742 = vsub.f32 %v1720, %v1736
  %v1743 = vsub.f32 %v1725, %v1739
  %v1744 = vmul.f32 %v1740, 1.442695
  %v1745 = vpow.pop %v1744
  %v1746 = vmul.f32 %v1741, 1.442695
  %v1747 = vpow.pop %v1746
  %v1748 = vmul.f32 %v1742, 1.442695
  %v1749 = vpow.pop %v1748
  %v1750 = vmul.f32 %v1743, 1.442695
  %v1751 = vpow.pop %v1750
  %v1752 = vsel %vm75, %v1745, 0.0
  %1753 = vadd.xlane.f32.xlu0 %v1752
  %v1754 = vpop.xlane.xlu0 %1753
  %v1755 = vsel %vm75, %v1747, 0.0
  %1756 = vadd.xlane.f32.xlu0 %v1755
  %v1757 = vpop.xlane.xlu0 %1756
  %v1758 = vsel %vm75, %v1749, 0.0
  %1759 = vadd.xlane.f32.xlu0 %v1758
  %v1760 = vpop.xlane.xlu0 %1759
  %v1761 = vsel %vm75, %v1751, 0.0
  %1762 = vadd.xlane.f32.xlu0 %v1761
  %v1763 = vpop.xlane.xlu0 %1762
  %v1764 = vrcp.pop %v1754
  %v1765 = vmul.f32 %v1745, %v1764
  %v1766 = vrcp.pop %v1757
  %v1767 = vmul.f32 %v1747, %v1766
  %v1768 = vrcp.pop %v1760
  %v1769 = vmul.f32 %v1749, %v1768
  %v1770 = vrcp.pop %v1763
  %v1771 = vmul.f32 %v1751, %v1770
  %1772 = vrot.lane.b32.xlu0 %v1327, 48
  %v1773 = vpop.permute.xlu0 %1772
  %1774 = vrot.lane.b32.xlu0 %v1332, 48
  %v1775 = vpop.permute.xlu0 %1774
  %1776 = vrot.lane.b32.xlu0 %v1337, 48
  %v1777 = vpop.permute.xlu0 %1776
  %1778 = vrot.lane.b32.xlu0 %v1342, 48
  %v1779 = vpop.permute.xlu0 %1778
  %v1785 = vsel %vm75, %v1765, 0
  %v1788 = vsel %vm75, %v1767, 0
  %v1791 = vsel %vm75, %v1769, 0
  %v1794 = vsel %vm75, %v1771, 0
  %1796 = vmatprep.subr.mxu0 0.0
  %1797 = vmatpush1.msra.mxu0 %v1773
  %1798 = vmatprep.subr.mxu0 0.0
  %1799 = vmatpush1.msra.mxu0 %v1775
  %1800 = vmatprep.subr.mxu0 0.0
  %1801 = vmatpush1.msra.mxu0 %v1777
  %1802 = vmatprep.subr.mxu0 0.0
  %1803 = vmatpush1.msra.mxu0 %v1779
  %1804 = vmatprep.subr.mxu0 0.0
  %1805 = vmatpush1.msra.mxu0 0.0
  %1806 = vmatprep.subr.mxu0 0.0
  %1807 = vmatpush1.msra.mxu0 0.0
  %1808 = vmatprep.subr.mxu0 0.0
  %1809 = vmatpush1.msra.mxu0 0.0
  %1810 = vmatprep.subr.mxu0 0.0
  %1811 = vmatpush1.msra.mxu0 0.0
  %1812 = vmatprep.subr.mxu0 0.0
  %1813 = vmatpush1.msra.mxu0 0.0
  %1814 = vmatprep.subr.mxu0 0.0
  %1815 = vmatpush1.msra.mxu0 0.0
  %1816 = vmatprep.subr.mxu0 0.0
  %1817 = vmatpush1.msra.mxu0 0.0
  %1818 = vmatprep.subr.mxu0 0.0
  %1819 = vmatpush1.msra.mxu0 0.0
  %1820 = vmatprep.subr.mxu0 0.0
  %1821 = vmatpush1.msra.mxu0 0.0
  %1822 = vmatprep.subr.mxu0 0.0
  %1823 = vmatpush1.msra.mxu0 0.0
  %1824 = vmatprep.subr.mxu0 0.0
  %1825 = vmatpush1.msra.mxu0 0.0
  %1826 = vmatprep.subr.mxu0 0.0
  %1827 = vmatpush1.msra.mxu0 0.0
  %1828 = vmatprep.subr.mxu0 0.0
  %1829 = vmatpush1.msra.mxu0 0.0
  %1830 = vmatprep.subr.mxu0 0.0
  %1831 = vmatpush1.msra.mxu0 0.0
  %1832 = vmatprep.subr.mxu0 0.0
  %1833 = vmatpush1.msra.mxu0 0.0
  %1834 = vmatprep.subr.mxu0 0.0
  %1835 = vmatpush1.msra.mxu0 0.0
  %1836 = vmatprep.subr.mxu0 0.0
  %1837 = vmatpush1.msra.mxu0 0.0
  %1838 = vmatprep.subr.mxu0 0.0
  %1839 = vmatpush1.msra.mxu0 0.0
  %1840 = vmatprep.subr.mxu0 0.0
  %1841 = vmatpush1.msra.mxu0 0.0
  %1842 = vmatprep.subr.mxu0 0.0
  %1843 = vmatpush1.msra.mxu0 0.0
  %1844 = vmatprep.subr.mxu0 0.0
  %1845 = vmatpush1.msra.mxu0 0.0
  %1846 = vmatprep.subr.mxu0 0.0
  %1847 = vmatpush1.msra.mxu0 0.0
  %1848 = vmatprep.subr.mxu0 0.0
  %1849 = vmatpush1.msra.mxu0 0.0
  %1850 = vmatprep.subr.mxu0 0.0
  %1851 = vmatpush1.msra.mxu0 0.0
  %1852 = vmatprep.subr.mxu0 0.0
  %1853 = vmatpush1.msra.mxu0 0.0
  %1854 = vmatprep.subr.mxu0 0.0
  %1855 = vmatpush1.msra.mxu0 0.0
  %1856 = vmatprep.subr.mxu0 0.0
  %1857 = vmatpush1.msra.mxu0 0.0
  %1858 = vmatprep.subr.mxu0 0.0
  %1859 = vmatpush1.msra.mxu0 0.0
  %1860 = vmatprep.mubr.f32.mxu0 0.0
  %1861 = vmatmul.mubr.f32.gmra.mrb[0].mxu0 %v1785
  %v1862 = vpop.f32.mrb[0].mxu0
  %v1863 = vadd.f32 0.0, %v1862
  %v1864 = vpop.f32.mrb[0].mxu0
  %1865 = vmatprep.mubr.f32.mxu0 0.0
  %1866 = vmatmul.mubr.f32.gmra.mrb[0].mxu0 %v1788
  %v1867 = vpop.f32.mrb[0].mxu0
  %v1868 = vadd.f32 0.0, %v1867
  %v1869 = vpop.f32.mrb[0].mxu0
  %1870 = vmatprep.mubr.f32.mxu0 0.0
  %1871 = vmatmul.mubr.f32.gmra.mrb[0].mxu0 %v1791
  %v1872 = vpop.f32.mrb[0].mxu0
  %v1873 = vadd.f32 0.0, %v1872
  %v1874 = vpop.f32.mrb[0].mxu0
  %1875 = vmatprep.mubr.f32.mxu0 0.0
  %1876 = vmatmul.mubr.f32.gmra.mrb[0].mxu0 %v1794
  %v1877 = vpop.f32.mrb[0].mxu0
  %v1878 = vadd.f32 0.0, %v1877
  %v1879 = vpop.f32.mrb[0].mxu0
  %1880 = vdwg.mxu0
  %1885 = vrot.lane.b32.xlu0 %v1863, 16
  %v1886 = vpop.permute.xlu0 %1885
  %1887 = vrot.lane.b32.xlu0 %v1868, 16
  %v1888 = vpop.permute.xlu0 %1887
  %1889 = vrot.lane.b32.xlu0 %v1873, 16
  %v1890 = vpop.permute.xlu0 %1889
  %1891 = vrot.lane.b32.xlu0 %v1878, 16
  %v1892 = vpop.permute.xlu0 %1891
  %v1897 = vsel %vm185, %v1593, %v1886
  %v1898 = vsel %vm185, %v1598, %v1888
  %v1899 = vsel %vm185, %v1603, %v1890
  %v1900 = vsel %vm185, %v1608, %v1892
  %s1901 = scalar_lea.vmem %s5, 32
  %v1902 = vld [vmem:[%s1901] sm:$0xff]
  %v1903 = vld [vmem:[%s1901 + $0x8] sm:$0xff]
  %v1904 = vld [vmem:[%s1901 + $0x10] sm:$0xff]
  %v1905 = vld [vmem:[%s1901 + $0x18] sm:$0xff]
  %s1906 = scalar_lea.vmem %s6, 1
  %v1907 = vld [vmem:[%s1906] sm:$0x1]
  %v1909 = vlaneseq
  %v1910 = vshrl.u32 %v1909, 7
  %v1911 = vsub.s32 0, %v1910
  %v1912 = vrot.slane %v1907, %v1911
  %v1915 = vsel %vm75, %v1897, 0
  %v1918 = vsel %vm75, %v1898, 0
  %v1921 = vsel %vm75, %v1899, 0
  %v1924 = vsel %vm75, %v1900, 0
  %1926 = vmatprep.subr.mxu0 0.0
  %1927 = vmatpush1.msra.mxu0 %v1902
  %1928 = vmatprep.subr.mxu0 0.0
  %1929 = vmatpush1.msra.mxu0 %v1903
  %1930 = vmatprep.subr.mxu0 0.0
  %1931 = vmatpush1.msra.mxu0 %v1904
  %1932 = vmatprep.subr.mxu0 0.0
  %1933 = vmatpush1.msra.mxu0 %v1905
  %1934 = vmatprep.subr.mxu0 0.0
  %1935 = vmatpush1.msra.mxu0 0.0
  %1936 = vmatprep.subr.mxu0 0.0
  %1937 = vmatpush1.msra.mxu0 0.0
  %1938 = vmatprep.subr.mxu0 0.0
  %1939 = vmatpush1.msra.mxu0 0.0
  %1940 = vmatprep.subr.mxu0 0.0
  %1941 = vmatpush1.msra.mxu0 0.0
  %1942 = vmatprep.subr.mxu0 0.0
  %1943 = vmatpush1.msra.mxu0 0.0
  %1944 = vmatprep.subr.mxu0 0.0
  %1945 = vmatpush1.msra.mxu0 0.0
  %1946 = vmatprep.subr.mxu0 0.0
  %1947 = vmatpush1.msra.mxu0 0.0
  %1948 = vmatprep.subr.mxu0 0.0
  %1949 = vmatpush1.msra.mxu0 0.0
  %1950 = vmatprep.subr.mxu0 0.0
  %1951 = vmatpush1.msra.mxu0 0.0
  %1952 = vmatprep.subr.mxu0 0.0
  %1953 = vmatpush1.msra.mxu0 0.0
  %1954 = vmatprep.subr.mxu0 0.0
  %1955 = vmatpush1.msra.mxu0 0.0
  %1956 = vmatprep.subr.mxu0 0.0
  %1957 = vmatpush1.msra.mxu0 0.0
  %1958 = vmatprep.subr.mxu0 0.0
  %1959 = vmatpush1.msra.mxu0 0.0
  %1960 = vmatprep.subr.mxu0 0.0
  %1961 = vmatpush1.msra.mxu0 0.0
  %1962 = vmatprep.subr.mxu0 0.0
  %1963 = vmatpush1.msra.mxu0 0.0
  %1964 = vmatprep.subr.mxu0 0.0
  %1965 = vmatpush1.msra.mxu0 0.0
  %1966 = vmatprep.subr.mxu0 0.0
  %1967 = vmatpush1.msra.mxu0 0.0
  %1968 = vmatprep.subr.mxu0 0.0
  %1969 = vmatpush1.msra.mxu0 0.0
  %1970 = vmatprep.subr.mxu0 0.0
  %1971 = vmatpush1.msra.mxu0 0.0
  %1972 = vmatprep.subr.mxu0 0.0
  %1973 = vmatpush1.msra.mxu0 0.0
  %1974 = vmatprep.subr.mxu0 0.0
  %1975 = vmatpush1.msra.mxu0 0.0
  %1976 = vmatprep.subr.mxu0 0.0
  %1977 = vmatpush1.msra.mxu0 0.0
  %1978 = vmatprep.subr.mxu0 0.0
  %1979 = vmatpush1.msra.mxu0 0.0
  %1980 = vmatprep.subr.mxu0 0.0
  %1981 = vmatpush1.msra.mxu0 0.0
  %1982 = vmatprep.subr.mxu0 0.0
  %1983 = vmatpush1.msra.mxu0 0.0
  %1984 = vmatprep.subr.mxu0 0.0
  %1985 = vmatpush1.msra.mxu0 0.0
  %1986 = vmatprep.subr.mxu0 0.0
  %1987 = vmatpush1.msra.mxu0 0.0
  %1988 = vmatprep.subr.mxu0 0.0
  %1989 = vmatpush1.msra.mxu0 0.0
  %1990 = vmatprep.mubr.f32.mxu0 0.0
  %1991 = vmatmul.mubr.f32.gmra.mrb[0].mxu0 %v1915
  %v1992 = vpop.f32.mrb[0].mxu0
  %v1993 = vadd.f32 %v1912, %v1992
  %v1994 = vpop.f32.mrb[0].mxu0
  %1995 = vmatprep.mubr.f32.mxu0 0.0
  %1996 = vmatmul.mubr.f32.gmra.mrb[0].mxu0 %v1918
  %v1997 = vpop.f32.mrb[0].mxu0
  %v1998 = vadd.f32 %v1912, %v1997
  %v1999 = vpop.f32.mrb[0].mxu0
  %2000 = vmatprep.mubr.f32.mxu0 0.0
  %2001 = vmatmul.mubr.f32.gmra.mrb[0].mxu0 %v1921
  %v2002 = vpop.f32.mrb[0].mxu0
  %v2003 = vadd.f32 %v1912, %v2002
  %v2004 = vpop.f32.mrb[0].mxu0
  %2005 = vmatprep.mubr.f32.mxu0 0.0
  %2006 = vmatmul.mubr.f32.gmra.mrb[0].mxu0 %v1924
  %v2007 = vpop.f32.mrb[0].mxu0
  %v2008 = vadd.f32 %v1912, %v2007
  %v2009 = vpop.f32.mrb[0].mxu0
  %2010 = vdwg.mxu0
  %v2011 = vadd.f32 %v1231, %v1993
  %v2012 = vadd.f32 %v1232, %v1998
  %v2013 = vadd.f32 %v1233, %v2003
  %v2014 = vadd.f32 %v1234, %v2008
  %v2015 = vsel %vm75, %v2011, 0.0
  %2016 = vadd.xlane.f32.xlu0 %v2015
  %v2017 = vpop.xlane.xlu0 %2016
  %v2018 = vsel %vm75, %v2012, 0.0
  %2019 = vadd.xlane.f32.xlu0 %v2018
  %v2020 = vpop.xlane.xlu0 %2019
  %v2021 = vsel %vm75, %v2013, 0.0
  %2022 = vadd.xlane.f32.xlu0 %v2021
  %v2023 = vpop.xlane.xlu0 %2022
  %v2024 = vsel %vm75, %v2014, 0.0
  %2025 = vadd.xlane.f32.xlu0 %v2024
  %v2026 = vpop.xlane.xlu0 %2025
  %v2027 = vmul.f32 %v2017, 0.03125
  %v2028 = vmul.f32 %v2020, 0.03125
  %v2029 = vmul.f32 %v2023, 0.03125
  %v2030 = vmul.f32 %v2026, 0.03125
  %v2031 = vmul.f32 %v2011, %v2011
  %v2032 = vmul.f32 %v2012, %v2012
  %v2033 = vmul.f32 %v2013, %v2013
  %v2034 = vmul.f32 %v2014, %v2014
  %v2035 = vsel %vm75, %v2031, 0.0
  %2036 = vadd.xlane.f32.xlu0 %v2035
  %v2037 = vpop.xlane.xlu0 %2036
  %v2038 = vsel %vm75, %v2032, 0.0
  %2039 = vadd.xlane.f32.xlu0 %v2038
  %v2040 = vpop.xlane.xlu0 %2039
  %v2041 = vsel %vm75, %v2033, 0.0
  %2042 = vadd.xlane.f32.xlu0 %v2041
  %v2043 = vpop.xlane.xlu0 %2042
  %v2044 = vsel %vm75, %v2034, 0.0
  %2045 = vadd.xlane.f32.xlu0 %v2044
  %v2046 = vpop.xlane.xlu0 %2045
  %v2047 = vmul.f32 %v2037, 0.03125
  %v2048 = vmul.f32 %v2040, 0.03125
  %v2049 = vmul.f32 %v2043, 0.03125
  %v2050 = vmul.f32 %v2046, 0.03125
  %v2051 = vmul.f32 %v2027, %v2027
  %v2052 = vmul.f32 %v2028, %v2028
  %v2053 = vmul.f32 %v2029, %v2029
  %v2054 = vmul.f32 %v2030, %v2030
  %v2055 = vsub.f32 %v2047, %v2051
  %v2056 = vsub.f32 %v2048, %v2052
  %v2057 = vsub.f32 %v2049, %v2053
  %v2058 = vsub.f32 %v2050, %v2054
  %v2059 = vsub.f32 %v2011, %v2027
  %v2060 = vsub.f32 %v2012, %v2028
  %v2061 = vsub.f32 %v2013, %v2029
  %v2062 = vsub.f32 %v2014, %v2030
  %v2063 = vadd.f32 %v2055, 1e-05
  %v2064 = vadd.f32 %v2056, 1e-05
  %v2065 = vadd.f32 %v2057, 1e-05
  %v2066 = vadd.f32 %v2058, 1e-05
  %v2067 = vrsqrt.pop %v2063
  %v2068 = vrsqrt.pop %v2064
  %v2069 = vrsqrt.pop %v2065
  %v2070 = vrsqrt.pop %v2066
  %v2071 = vmul.f32 %v2059, %v2067
  %v2072 = vmul.f32 %v2060, %v2068
  %v2073 = vmul.f32 %v2061, %v2069
  %v2074 = vmul.f32 %v2062, %v2070
  %s2075 = scalar_lea.vmem %s7, 1
  %v2076 = vld [vmem:[%s2075] sm:$0x1]
  %v2078 = vlaneseq
  %v2079 = vshrl.u32 %v2078, 7
  %v2080 = vsub.s32 0, %v2079
  %v2081 = vrot.slane %v2076, %v2080
  %v2083 = vmul.f32 %v2071, %v2081
  %v2084 = vmul.f32 %v2072, %v2081
  %v2085 = vmul.f32 %v2073, %v2081
  %v2086 = vmul.f32 %v2074, %v2081
  %s2087 = scalar_lea.vmem %s8, 1
  %v2088 = vld [vmem:[%s2087] sm:$0x1]
  %v2090 = vlaneseq
  %v2091 = vshrl.u32 %v2090, 7
  %v2092 = vsub.s32 0, %v2091
  %v2093 = vrot.slane %v2088, %v2092
  %v2095 = vadd.f32 %v2083, %v2093
  %v2096 = vadd.f32 %v2084, %v2093
  %v2097 = vadd.f32 %v2085, %v2093
  %v2098 = vadd.f32 %v2086, %v2093
  %s2099 = scalar_lea.vmem %s9, 32
  %v2100 = vld [vmem:[%s2099] sm:$0xff]
  %v2101 = vld [vmem:[%s2099 + $0x8] sm:$0xff]
  %v2102 = vld [vmem:[%s2099 + $0x10] sm:$0xff]
  %v2103 = vld [vmem:[%s2099 + $0x18] sm:$0xff]
  %s2104 = scalar_lea.vmem %s10, 1
  %v2105 = vld [vmem:[%s2104] sm:$0x1]
  %v2107 = vlaneseq
  %v2108 = vshrl.u32 %v2107, 7
  %v2109 = vsub.s32 0, %v2108
  %v2110 = vrot.slane %v2105, %v2109
  %v2113 = vsel %vm75, %v2095, 0
  %v2116 = vsel %vm75, %v2096, 0
  %v2119 = vsel %vm75, %v2097, 0
  %v2122 = vsel %vm75, %v2098, 0
  %2124 = vmatprep.subr.mxu0 0.0
  %2125 = vmatpush1.msra.mxu0 %v2100
  %2126 = vmatprep.subr.mxu0 0.0
  %2127 = vmatpush1.msra.mxu0 %v2101
  %2128 = vmatprep.subr.mxu0 0.0
  %2129 = vmatpush1.msra.mxu0 %v2102
  %2130 = vmatprep.subr.mxu0 0.0
  %2131 = vmatpush1.msra.mxu0 %v2103
  %2132 = vmatprep.subr.mxu0 0.0
  %2133 = vmatpush1.msra.mxu0 0.0
  %2134 = vmatprep.subr.mxu0 0.0
  %2135 = vmatpush1.msra.mxu0 0.0
  %2136 = vmatprep.subr.mxu0 0.0
  %2137 = vmatpush1.msra.mxu0 0.0
  %2138 = vmatprep.subr.mxu0 0.0
  %2139 = vmatpush1.msra.mxu0 0.0
  %2140 = vmatprep.subr.mxu0 0.0
  %2141 = vmatpush1.msra.mxu0 0.0
  %2142 = vmatprep.subr.mxu0 0.0
  %2143 = vmatpush1.msra.mxu0 0.0
  %2144 = vmatprep.subr.mxu0 0.0
  %2145 = vmatpush1.msra.mxu0 0.0
  %2146 = vmatprep.subr.mxu0 0.0
  %2147 = vmatpush1.msra.mxu0 0.0
  %2148 = vmatprep.subr.mxu0 0.0
  %2149 = vmatpush1.msra.mxu0 0.0
  %2150 = vmatprep.subr.mxu0 0.0
  %2151 = vmatpush1.msra.mxu0 0.0
  %2152 = vmatprep.subr.mxu0 0.0
  %2153 = vmatpush1.msra.mxu0 0.0
  %2154 = vmatprep.subr.mxu0 0.0
  %2155 = vmatpush1.msra.mxu0 0.0
  %2156 = vmatprep.subr.mxu0 0.0
  %2157 = vmatpush1.msra.mxu0 0.0
  %2158 = vmatprep.subr.mxu0 0.0
  %2159 = vmatpush1.msra.mxu0 0.0
  %2160 = vmatprep.subr.mxu0 0.0
  %2161 = vmatpush1.msra.mxu0 0.0
  %2162 = vmatprep.subr.mxu0 0.0
  %2163 = vmatpush1.msra.mxu0 0.0
  %2164 = vmatprep.subr.mxu0 0.0
  %2165 = vmatpush1.msra.mxu0 0.0
  %2166 = vmatprep.subr.mxu0 0.0
  %2167 = vmatpush1.msra.mxu0 0.0
  %2168 = vmatprep.subr.mxu0 0.0
  %2169 = vmatpush1.msra.mxu0 0.0
  %2170 = vmatprep.subr.mxu0 0.0
  %2171 = vmatpush1.msra.mxu0 0.0
  %2172 = vmatprep.subr.mxu0 0.0
  %2173 = vmatpush1.msra.mxu0 0.0
  %2174 = vmatprep.subr.mxu0 0.0
  %2175 = vmatpush1.msra.mxu0 0.0
  %2176 = vmatprep.subr.mxu0 0.0
  %2177 = vmatpush1.msra.mxu0 0.0
  %2178 = vmatprep.subr.mxu0 0.0
  %2179 = vmatpush1.msra.mxu0 0.0
  %2180 = vmatprep.subr.mxu0 0.0
  %2181 = vmatpush1.msra.mxu0 0.0
  %2182 = vmatprep.subr.mxu0 0.0
  %2183 = vmatpush1.msra.mxu0 0.0
  %2184 = vmatprep.subr.mxu0 0.0
  %2185 = vmatpush1.msra.mxu0 0.0
  %2186 = vmatprep.subr.mxu0 0.0
  %2187 = vmatpush1.msra.mxu0 0.0
  %2188 = vmatprep.mubr.f32.mxu0 0.0
  %2189 = vmatmul.mubr.f32.gmra.mrb[0].mxu0 %v2113
  %v2190 = vpop.f32.mrb[0].mxu0
  %v2191 = vadd.f32 %v2110, %v2190
  %v2192 = vpop.f32.mrb[0].mxu0
  %2193 = vmatprep.mubr.f32.mxu0 0.0
  %2194 = vmatmul.mubr.f32.gmra.mrb[0].mxu0 %v2116
  %v2195 = vpop.f32.mrb[0].mxu0
  %v2196 = vadd.f32 %v2110, %v2195
  %v2197 = vpop.f32.mrb[0].mxu0
  %2198 = vmatprep.mubr.f32.mxu0 0.0
  %2199 = vmatmul.mubr.f32.gmra.mrb[0].mxu0 %v2119
  %v2200 = vpop.f32.mrb[0].mxu0
  %v2201 = vadd.f32 %v2110, %v2200
  %v2202 = vpop.f32.mrb[0].mxu0
  %2203 = vmatprep.mubr.f32.mxu0 0.0
  %2204 = vmatmul.mubr.f32.gmra.mrb[0].mxu0 %v2122
  %v2205 = vpop.f32.mrb[0].mxu0
  %v2206 = vadd.f32 %v2110, %v2205
  %v2207 = vpop.f32.mrb[0].mxu0
  %2208 = vdwg.mxu0
  %v2209 = vmax.f32 %v2191, 0.0
  %v2210 = vmax.f32 %v2196, 0.0
  %v2211 = vmax.f32 %v2201, 0.0
  %v2212 = vmax.f32 %v2206, 0.0
  %s2213 = scalar_lea.vmem %s11, 64
  %v2214 = vld [vmem:[%s2213] sm:$0xff]
  %v2215 = vld [vmem:[%s2213 + $0x8] sm:$0xff]
  %v2216 = vld [vmem:[%s2213 + $0x10] sm:$0xff]
  %v2217 = vld [vmem:[%s2213 + $0x18] sm:$0xff]
  %v2218 = vld [vmem:[%s2213 + $0x20] sm:$0xff]
  %v2219 = vld [vmem:[%s2213 + $0x28] sm:$0xff]
  %v2220 = vld [vmem:[%s2213 + $0x30] sm:$0xff]
  %v2221 = vld [vmem:[%s2213 + $0x38] sm:$0xff]
  %s2222 = scalar_lea.vmem %s12, 1
  %v2223 = vld [vmem:[%s2222] sm:$0x1]
  %v2225 = vlaneseq
  %v2226 = vshrl.u32 %v2225, 7
  %v2227 = vsub.s32 0, %v2226
  %v2228 = vrot.slane %v2223, %v2227
  %v2231 = vsel %vm1051, %v2209, 0
  %v2234 = vsel %vm1051, %v2210, 0
  %v2237 = vsel %vm1051, %v2211, 0
  %v2240 = vsel %vm1051, %v2212, 0
  %2242 = vmatprep.subr.mxu0 0.0
  %2243 = vmatpush1.msra.mxu0 %v2214
  %2244 = vmatprep.subr.mxu0 0.0
  %2245 = vmatpush1.msra.mxu0 %v2215
  %2246 = vmatprep.subr.mxu0 0.0
  %2247 = vmatpush1.msra.mxu0 %v2216
  %2248 = vmatprep.subr.mxu0 0.0
  %2249 = vmatpush1.msra.mxu0 %v2217
  %2250 = vmatprep.subr.mxu0 0.0
  %2251 = vmatpush1.msra.mxu0 %v2218
  %2252 = vmatprep.subr.mxu0 0.0
  %2253 = vmatpush1.msra.mxu0 %v2219
  %2254 = vmatprep.subr.mxu0 0.0
  %2255 = vmatpush1.msra.mxu0 %v2220
  %2256 = vmatprep.subr.mxu0 0.0
  %2257 = vmatpush1.msra.mxu0 %v2221
  %2258 = vmatprep.subr.mxu0 0.0
  %2259 = vmatpush1.msra.mxu0 0.0
  %2260 = vmatprep.subr.mxu0 0.0
  %2261 = vmatpush1.msra.mxu0 0.0
  %2262 = vmatprep.subr.mxu0 0.0
  %2263 = vmatpush1.msra.mxu0 0.0
  %2264 = vmatprep.subr.mxu0 0.0
  %2265 = vmatpush1.msra.mxu0 0.0
  %2266 = vmatprep.subr.mxu0 0.0
  %2267 = vmatpush1.msra.mxu0 0.0
  %2268 = vmatprep.subr.mxu0 0.0
  %2269 = vmatpush1.msra.mxu0 0.0
  %2270 = vmatprep.subr.mxu0 0.0
  %2271 = vmatpush1.msra.mxu0 0.0
  %2272 = vmatprep.subr.mxu0 0.0
  %2273 = vmatpush1.msra.mxu0 0.0
  %2274 = vmatprep.subr.mxu0 0.0
  %2275 = vmatpush1.msra.mxu0 0.0
  %2276 = vmatprep.subr.mxu0 0.0
  %2277 = vmatpush1.msra.mxu0 0.0
  %2278 = vmatprep.subr.mxu0 0.0
  %2279 = vmatpush1.msra.mxu0 0.0
  %2280 = vmatprep.subr.mxu0 0.0
  %2281 = vmatpush1.msra.mxu0 0.0
  %2282 = vmatprep.subr.mxu0 0.0
  %2283 = vmatpush1.msra.mxu0 0.0
  %2284 = vmatprep.subr.mxu0 0.0
  %2285 = vmatpush1.msra.mxu0 0.0
  %2286 = vmatprep.subr.mxu0 0.0
  %2287 = vmatpush1.msra.mxu0 0.0
  %2288 = vmatprep.subr.mxu0 0.0
  %2289 = vmatpush1.msra.mxu0 0.0
  %2290 = vmatprep.subr.mxu0 0.0
  %2291 = vmatpush1.msra.mxu0 0.0
  %2292 = vmatprep.subr.mxu0 0.0
  %2293 = vmatpush1.msra.mxu0 0.0
  %2294 = vmatprep.subr.mxu0 0.0
  %2295 = vmatpush1.msra.mxu0 0.0
  %2296 = vmatprep.subr.mxu0 0.0
  %2297 = vmatpush1.msra.mxu0 0.0
  %2298 = vmatprep.subr.mxu0 0.0
  %2299 = vmatpush1.msra.mxu0 0.0
  %2300 = vmatprep.subr.mxu0 0.0
  %2301 = vmatpush1.msra.mxu0 0.0
  %2302 = vmatprep.subr.mxu0 0.0
  %2303 = vmatpush1.msra.mxu0 0.0
  %2304 = vmatprep.subr.mxu0 0.0
  %2305 = vmatpush1.msra.mxu0 0.0
  %2306 = vmatprep.mubr.f32.mxu0 0.0
  %2307 = vmatmul.mubr.f32.gmra.mrb[0].mxu0 %v2231
  %v2308 = vpop.f32.mrb[0].mxu0
  %v2309 = vadd.f32 %v2228, %v2308
  %v2310 = vpop.f32.mrb[0].mxu0
  %2311 = vmatprep.mubr.f32.mxu0 0.0
  %2312 = vmatmul.mubr.f32.gmra.mrb[0].mxu0 %v2234
  %v2313 = vpop.f32.mrb[0].mxu0
  %v2314 = vadd.f32 %v2228, %v2313
  %v2315 = vpop.f32.mrb[0].mxu0
  %2316 = vmatprep.mubr.f32.mxu0 0.0
  %2317 = vmatmul.mubr.f32.gmra.mrb[0].mxu0 %v2237
  %v2318 = vpop.f32.mrb[0].mxu0
  %v2319 = vadd.f32 %v2228, %v2318
  %v2320 = vpop.f32.mrb[0].mxu0
  %2321 = vmatprep.mubr.f32.mxu0 0.0
  %2322 = vmatmul.mubr.f32.gmra.mrb[0].mxu0 %v2240
  %v2323 = vpop.f32.mrb[0].mxu0
  %v2324 = vadd.f32 %v2228, %v2323
  %v2325 = vpop.f32.mrb[0].mxu0
  %2326 = vdwg.mxu0
  %v2327 = vadd.f32 %v2095, %v2309
  %v2328 = vadd.f32 %v2096, %v2314
  %v2329 = vadd.f32 %v2097, %v2319
  %v2330 = vadd.f32 %v2098, %v2324
  %v2331 = vsel %vm75, %v2327, 0.0
  %2332 = vadd.xlane.f32.xlu0 %v2331
  %v2333 = vpop.xlane.xlu0 %2332
  %v2334 = vsel %vm75, %v2328, 0.0
  %2335 = vadd.xlane.f32.xlu0 %v2334
  %v2336 = vpop.xlane.xlu0 %2335
  %v2337 = vsel %vm75, %v2329, 0.0
  %2338 = vadd.xlane.f32.xlu0 %v2337
  %v2339 = vpop.xlane.xlu0 %2338
  %v2340 = vsel %vm75, %v2330, 0.0
  %2341 = vadd.xlane.f32.xlu0 %v2340
  %v2342 = vpop.xlane.xlu0 %2341
  %v2343 = vmul.f32 %v2333, 0.03125
  %v2344 = vmul.f32 %v2336, 0.03125
  %v2345 = vmul.f32 %v2339, 0.03125
  %v2346 = vmul.f32 %v2342, 0.03125
  %v2347 = vmul.f32 %v2327, %v2327
  %v2348 = vmul.f32 %v2328, %v2328
  %v2349 = vmul.f32 %v2329, %v2329
  %v2350 = vmul.f32 %v2330, %v2330
  %v2351 = vsel %vm75, %v2347, 0.0
  %2352 = vadd.xlane.f32.xlu0 %v2351
  %v2353 = vpop.xlane.xlu0 %2352
  %v2354 = vsel %vm75, %v2348, 0.0
  %2355 = vadd.xlane.f32.xlu0 %v2354
  %v2356 = vpop.xlane.xlu0 %2355
  %v2357 = vsel %vm75, %v2349, 0.0
  %2358 = vadd.xlane.f32.xlu0 %v2357
  %v2359 = vpop.xlane.xlu0 %2358
  %v2360 = vsel %vm75, %v2350, 0.0
  %2361 = vadd.xlane.f32.xlu0 %v2360
  %v2362 = vpop.xlane.xlu0 %2361
  %v2363 = vmul.f32 %v2353, 0.03125
  %v2364 = vmul.f32 %v2356, 0.03125
  %v2365 = vmul.f32 %v2359, 0.03125
  %v2366 = vmul.f32 %v2362, 0.03125
  %v2367 = vmul.f32 %v2343, %v2343
  %v2368 = vmul.f32 %v2344, %v2344
  %v2369 = vmul.f32 %v2345, %v2345
  %v2370 = vmul.f32 %v2346, %v2346
  %v2371 = vsub.f32 %v2363, %v2367
  %v2372 = vsub.f32 %v2364, %v2368
  %v2373 = vsub.f32 %v2365, %v2369
  %v2374 = vsub.f32 %v2366, %v2370
  %v2375 = vsub.f32 %v2327, %v2343
  %v2376 = vsub.f32 %v2328, %v2344
  %v2377 = vsub.f32 %v2329, %v2345
  %v2378 = vsub.f32 %v2330, %v2346
  %v2379 = vadd.f32 %v2371, 1e-05
  %v2380 = vadd.f32 %v2372, 1e-05
  %v2381 = vadd.f32 %v2373, 1e-05
  %v2382 = vadd.f32 %v2374, 1e-05
  %v2383 = vrsqrt.pop %v2379
  %v2384 = vrsqrt.pop %v2380
  %v2385 = vrsqrt.pop %v2381
  %v2386 = vrsqrt.pop %v2382
  %v2387 = vmul.f32 %v2375, %v2383
  %v2388 = vmul.f32 %v2376, %v2384
  %v2389 = vmul.f32 %v2377, %v2385
  %v2390 = vmul.f32 %v2378, %v2386
  %s2391 = scalar_lea.vmem %s13, 1
  %v2392 = vld [vmem:[%s2391] sm:$0x1]
  %v2394 = vlaneseq
  %v2395 = vshrl.u32 %v2394, 7
  %v2396 = vsub.s32 0, %v2395
  %v2397 = vrot.slane %v2392, %v2396
  %v2399 = vmul.f32 %v2387, %v2397
  %v2400 = vmul.f32 %v2388, %v2397
  %v2401 = vmul.f32 %v2389, %v2397
  %v2402 = vmul.f32 %v2390, %v2397
  %s2403 = scalar_lea.vmem %s14, 1
  %v2404 = vld [vmem:[%s2403] sm:$0x1]
  %v2406 = vlaneseq
  %v2407 = vshrl.u32 %v2406, 7
  %v2408 = vsub.s32 0, %v2407
  %v2409 = vrot.slane %v2404, %v2408
  %v2411 = vadd.f32 %v2399, %v2409
  %v2412 = vadd.f32 %v2400, %v2409
  %v2413 = vadd.f32 %v2401, %v2409
  %v2414 = vadd.f32 %v2402, %v2409
  %v2415 = vld [vmem:[%s15] sm:$0xff]
  %v2416 = vld [vmem:[%s15 + $0x8] sm:$0xff]
  %v2417 = vld [vmem:[%s15 + $0x10] sm:$0xff]
  %v2418 = vld [vmem:[%s15 + $0x18] sm:$0xff]
  %v2419 = vld [vmem:[%s16] sm:$0x1]
  %v2421 = vlaneseq
  %v2422 = vshrl.u32 %v2421, 7
  %v2423 = vsub.s32 0, %v2422
  %v2424 = vrot.slane %v2419, %v2423
  %v2427 = vsel %vm75, %v2411, 0
  %v2430 = vsel %vm75, %v2412, 0
  %v2433 = vsel %vm75, %v2413, 0
  %v2436 = vsel %vm75, %v2414, 0
  %2438 = vmatprep.subr.mxu0 0.0
  %2439 = vmatpush1.msra.mxu0 %v2415
  %2440 = vmatprep.subr.mxu0 0.0
  %2441 = vmatpush1.msra.mxu0 %v2416
  %2442 = vmatprep.subr.mxu0 0.0
  %2443 = vmatpush1.msra.mxu0 %v2417
  %2444 = vmatprep.subr.mxu0 0.0
  %2445 = vmatpush1.msra.mxu0 %v2418
  %2446 = vmatprep.subr.mxu0 0.0
  %2447 = vmatpush1.msra.mxu0 0.0
  %2448 = vmatprep.subr.mxu0 0.0
  %2449 = vmatpush1.msra.mxu0 0.0
  %2450 = vmatprep.subr.mxu0 0.0
  %2451 = vmatpush1.msra.mxu0 0.0
  %2452 = vmatprep.subr.mxu0 0.0
  %2453 = vmatpush1.msra.mxu0 0.0
  %2454 = vmatprep.subr.mxu0 0.0
  %2455 = vmatpush1.msra.mxu0 0.0
  %2456 = vmatprep.subr.mxu0 0.0
  %2457 = vmatpush1.msra.mxu0 0.0
  %2458 = vmatprep.subr.mxu0 0.0
  %2459 = vmatpush1.msra.mxu0 0.0
  %2460 = vmatprep.subr.mxu0 0.0
  %2461 = vmatpush1.msra.mxu0 0.0
  %2462 = vmatprep.subr.mxu0 0.0
  %2463 = vmatpush1.msra.mxu0 0.0
  %2464 = vmatprep.subr.mxu0 0.0
  %2465 = vmatpush1.msra.mxu0 0.0
  %2466 = vmatprep.subr.mxu0 0.0
  %2467 = vmatpush1.msra.mxu0 0.0
  %2468 = vmatprep.subr.mxu0 0.0
  %2469 = vmatpush1.msra.mxu0 0.0
  %2470 = vmatprep.subr.mxu0 0.0
  %2471 = vmatpush1.msra.mxu0 0.0
  %2472 = vmatprep.subr.mxu0 0.0
  %2473 = vmatpush1.msra.mxu0 0.0
  %2474 = vmatprep.subr.mxu0 0.0
  %2475 = vmatpush1.msra.mxu0 0.0
  %2476 = vmatprep.subr.mxu0 0.0
  %2477 = vmatpush1.msra.mxu0 0.0
  %2478 = vmatprep.subr.mxu0 0.0
  %2479 = vmatpush1.msra.mxu0 0.0
  %2480 = vmatprep.subr.mxu0 0.0
  %2481 = vmatpush1.msra.mxu0 0.0
  %2482 = vmatprep.subr.mxu0 0.0
  %2483 = vmatpush1.msra.mxu0 0.0
  %2484 = vmatprep.subr.mxu0 0.0
  %2485 = vmatpush1.msra.mxu0 0.0
  %2486 = vmatprep.subr.mxu0 0.0
  %2487 = vmatpush1.msra.mxu0 0.0
  %2488 = vmatprep.subr.mxu0 0.0
  %2489 = vmatpush1.msra.mxu0 0.0
  %2490 = vmatprep.subr.mxu0 0.0
  %2491 = vmatpush1.msra.mxu0 0.0
  %2492 = vmatprep.subr.mxu0 0.0
  %2493 = vmatpush1.msra.mxu0 0.0
  %2494 = vmatprep.subr.mxu0 0.0
  %2495 = vmatpush1.msra.mxu0 0.0
  %2496 = vmatprep.subr.mxu0 0.0
  %2497 = vmatpush1.msra.mxu0 0.0
  %2498 = vmatprep.subr.mxu0 0.0
  %2499 = vmatpush1.msra.mxu0 0.0
  %2500 = vmatprep.subr.mxu0 0.0
  %2501 = vmatpush1.msra.mxu0 0.0
  %2502 = vmatprep.mubr.f32.mxu0 0.0
  %2503 = vmatmul.mubr.f32.gmra.mrb[0].mxu0 %v2427
  %v2504 = vpop.f32.mrb[0].mxu0
  %v2505 = vadd.f32 %v2424, %v2504
  %v2506 = vpop.f32.mrb[0].mxu0
  %2507 = vmatprep.mubr.f32.mxu0 0.0
  %2508 = vmatmul.mubr.f32.gmra.mrb[0].mxu0 %v2430
  %v2509 = vpop.f32.mrb[0].mxu0
  %v2510 = vadd.f32 %v2424, %v2509
  %v2511 = vpop.f32.mrb[0].mxu0
  %2512 = vmatprep.mubr.f32.mxu0 0.0
  %2513 = vmatmul.mubr.f32.gmra.mrb[0].mxu0 %v2433
  %v2514 = vpop.f32.mrb[0].mxu0
  %v2515 = vadd.f32 %v2424, %v2514
  %v2516 = vpop.f32.mrb[0].mxu0
  %2517 = vmatprep.mubr.f32.mxu0 0.0
  %2518 = vmatmul.mubr.f32.gmra.mrb[0].mxu0 %v2436
  %v2519 = vpop.f32.mrb[0].mxu0
  %v2520 = vadd.f32 %v2424, %v2519
  %v2521 = vpop.f32.mrb[0].mxu0
  %2522 = vdwg.mxu0
  %v2523 = vld [vmem:[%s2] sm:$0xf]
  %v2525 = vsel %vm75, %v2523, 0
  %2527 = vmatprep.subr.mxu0 0.0
  %2528 = vmatpush1.msra.mxu0 %v2505
  %2529 = vmatprep.subr.mxu0 0.0
  %2530 = vmatpush1.msra.mxu0 %v2510
  %2531 = vmatprep.subr.mxu0 0.0
  %2532 = vmatpush1.msra.mxu0 %v2515
  %2533 = vmatprep.subr.mxu0 0.0
  %2534 = vmatpush1.msra.mxu0 %v2520
  %2535 = vmatprep.subr.mxu0 0.0
  %2536 = vmatpush1.msra.mxu0 0.0
  %2537 = vmatprep.subr.mxu0 0.0
  %2538 = vmatpush1.msra.mxu0 0.0
  %2539 = vmatprep.subr.mxu0 0.0
  %2540 = vmatpush1.msra.mxu0 0.0
  %2541 = vmatprep.subr.mxu0 0.0
  %2542 = vmatpush1.msra.mxu0 0.0
  %2543 = vmatprep.subr.mxu0 0.0
  %2544 = vmatpush1.msra.mxu0 0.0
  %2545 = vmatprep.subr.mxu0 0.0
  %2546 = vmatpush1.msra.mxu0 0.0
  %2547 = vmatprep.subr.mxu0 0.0
  %2548 = vmatpush1.msra.mxu0 0.0
  %2549 = vmatprep.subr.mxu0 0.0
  %2550 = vmatpush1.msra.mxu0 0.0
  %2551 = vmatprep.subr.mxu0 0.0
  %2552 = vmatpush1.msra.mxu0 0.0
  %2553 = vmatprep.subr.mxu0 0.0
  %2554 = vmatpush1.msra.mxu0 0.0
  %2555 = vmatprep.subr.mxu0 0.0
  %2556 = vmatpush1.msra.mxu0 0.0
  %2557 = vmatprep.subr.mxu0 0.0
  %2558 = vmatpush1.msra.mxu0 0.0
  %2559 = vmatprep.subr.mxu0 0.0
  %2560 = vmatpush1.msra.mxu0 0.0
  %2561 = vmatprep.subr.mxu0 0.0
  %2562 = vmatpush1.msra.mxu0 0.0
  %2563 = vmatprep.subr.mxu0 0.0
  %2564 = vmatpush1.msra.mxu0 0.0
  %2565 = vmatprep.subr.mxu0 0.0
  %2566 = vmatpush1.msra.mxu0 0.0
  %2567 = vmatprep.subr.mxu0 0.0
  %2568 = vmatpush1.msra.mxu0 0.0
  %2569 = vmatprep.subr.mxu0 0.0
  %2570 = vmatpush1.msra.mxu0 0.0
  %2571 = vmatprep.subr.mxu0 0.0
  %2572 = vmatpush1.msra.mxu0 0.0
  %2573 = vmatprep.subr.mxu0 0.0
  %2574 = vmatpush1.msra.mxu0 0.0
  %2575 = vmatprep.subr.mxu0 0.0
  %2576 = vmatpush1.msra.mxu0 0.0
  %2577 = vmatprep.subr.mxu0 0.0
  %2578 = vmatpush1.msra.mxu0 0.0
  %2579 = vmatprep.subr.mxu0 0.0
  %2580 = vmatpush1.msra.mxu0 0.0
  %2581 = vmatprep.subr.mxu0 0.0
  %2582 = vmatpush1.msra.mxu0 0.0
  %2583 = vmatprep.subr.mxu0 0.0
  %2584 = vmatpush1.msra.mxu0 0.0
  %2585 = vmatprep.subr.mxu0 0.0
  %2586 = vmatpush1.msra.mxu0 0.0
  %2587 = vmatprep.subr.mxu0 0.0
  %2588 = vmatpush1.msra.mxu0 0.0
  %2589 = vmatprep.subr.mxu0 0.0
  %2590 = vmatpush1.msra.mxu0 0.0
  %2591 = vmatprep.mubr.f32.mxu0 0.0
  %2592 = vmatmul.mubr.f32.gmra.mrb[0].mxu0 %v2525
  %v2593 = vpop.f32.mrb[0].mxu0
  %v2594 = vadd.f32 0.0, %v2593
  %v2595 = vpop.f32.mrb[0].mxu0
  %2596 = vdwg.mxu0
  %v2597 = vmul.f32 %v2594, %v2594
  %vm2598 = vcmask 257024
  %v2599 = vsel %vm2598, %v2597, 0.0
  %2600 = vadd.xlane.f32.xlu0 %v2599
  %v2601 = vpop.xlane.xlu0 %2600
  %v2602 = vmax.f32 %v2601, 1e-24
  %v2603 = vrsqrt.pop %v2602
  %v2604 = vmul.f32 %v2594, %v2603
  %2605 = vst.msk [vmem:[%s17] sm:$0xf] %vm2598, %v2604
  // Predicated region
  $region70: #{forward.1} parent=0 // pred_check
    _
  $region71: #{forward.1} parent=0 // pred_check_branch
    %2607 = sbr.rel (0) target = $region73
  $region72: #{forward.1} parent=0 // pred_region
    _
  $region73: #{forward.1} parent=0 // pred_fallthru
    _
  // Predicated region
  $region74: #{forward.1} parent=0 // pred_check
    _
  $region75: #{forward.1} parent=0 // pred_check_branch
    %2609 = sbr.rel (0) target = $region77
  $region76: #{forward.1} parent=0 // pred_region
    _
  $region77: #{forward.1} parent=0 // pred_fallthru
    _

</llo_original>
